<compile_context>
chip_gen: v7x
topology: tpu7x:2x2x1
jax: 0.10.0
libtpu: 0.0.40
codegen_flags: <defaults>
</compile_context>

<pallas_src>
import functools
import math

import numpy as np
import jax
import jax.numpy as jnp
from jax.experimental import pallas as pl
from jax.experimental.pallas import tpu as pltpu


# ---------------------------------------------------------------------------
# Kernel 1: fused conv1(3x3,p1)+ReLU+pool2  ->  conv2(3x3,p1)+ReLU+pool2
# ---------------------------------------------------------------------------
def _conv_fused_kernel(g_ref, t1_ref, b1_ref, t2_ref, b2_ref, o_ref,
                       *, R, half1, half2):
    """One batch-block of B images, fully in VMEM.

    g_ref:  (4, B*R, 3*W*Cin)  row-groups of the height-padded image; group g,
            row (b, j) is [P[4j+g] | P[4j+g+1] | P[4j+g+2]] (lane-concatenated
            padded rows) so  group_g @ T1  is conv1 row 4j+g of image b.
    t1_ref: (3*W*Cin,  W*C1)   conv1 Toeplitz, dy-offsets stacked along K,
                               output columns ordered [even w | odd w].
    t2_ref: (3*(W/2)*C1, (W/2)*C2)  same for conv2.
    b1/b2:  (1, half1)/(1, half2)   channel bias tiled over pooled width (f32).
    o_ref:  (B*R, half2)       pooled conv2 output, lane-dense (128 here).
    R = H // 4 (pooled rows per image after each stage).
    """
    f32, bf16 = jnp.float32, jnp.bfloat16

    # ---- conv1 + ReLU + 2x2 pool -------------------------------------------
    T1 = t1_ref[...]
    c0 = jnp.dot(g_ref[0], T1, preferred_element_type=f32)   # conv rows 4j
    c1 = jnp.dot(g_ref[1], T1, preferred_element_type=f32)   # conv rows 4j+1
    c2 = jnp.dot(g_ref[2], T1, preferred_element_type=f32)   # conv rows 4j+2
    c3 = jnp.dot(g_ref[3], T1, preferred_element_type=f32)   # conv rows 4j+3
    ve = jnp.maximum(c0, c1)                                  # vertical pool (even rows)
    vo = jnp.maximum(c2, c3)                                  # vertical pool (odd rows)
    # horizontal pool = lane-half max, then bias + ReLU (f32 epilogue).
    y1e = jnp.maximum(jnp.maximum(ve[:, :half1], ve[:, half1:]) + b1_ref[...], 0.0)
    y1o = jnp.maximum(jnp.maximum(vo[:, :half1], vo[:, half1:]) + b1_ref[...], 0.0)

    # ---- build conv2 vertical slabs in VMEM ---------------------------------
    # Per image: padded rows Q[0..2R+1]; Q[2k+1]=y1e[k], Q[2k+2]=y1o[k],
    # Q[0]=Q[2R+1]=0.  s0[k]=Q[2k] (y1o shifted down, zero at k=0),
    # s3[k]=Q[2k+3] (y1e shifted up, zero at k=R-1).
    ridx = jax.lax.broadcasted_iota(jnp.int32, y1e.shape, 0)
    zrow = jnp.zeros((1, half1), f32)
    s0 = jnp.where(ridx % R == 0,     0.0,
                   jnp.concatenate([zrow, y1o[:-1]], axis=0))
    s3 = jnp.where(ridx % R == R - 1, 0.0,
                   jnp.concatenate([y1e[1:], zrow], axis=0))

    # ---- conv2 + ReLU + 2x2 pool -------------------------------------------
    u0 = jnp.concatenate([s0,  y1e, y1o], axis=1).astype(bf16)   # even conv2 rows
    u1 = jnp.concatenate([y1e, y1o, s3], axis=1).astype(bf16)    # odd  conv2 rows
    T2 = t2_ref[...]
    d0 = jnp.dot(u0, T2, preferred_element_type=f32)
    d1 = jnp.dot(u1, T2, preferred_element_type=f32)
    v2 = jnp.maximum(d0, d1)
    y2 = jnp.maximum(jnp.maximum(v2[:, :half2], v2[:, half2:]) + b2_ref[...], 0.0)
    o_ref[...] = y2.astype(o_ref.dtype)


# ---------------------------------------------------------------------------
# Kernel 2: structured MLP + image FC + fusion MLP, fully fused (concat-free)
# ---------------------------------------------------------------------------
def _head_kernel(xs_ref, xi_ref,
                 ws1_ref, bs1_ref, ws2_ref, bs2_ref,
                 wifc_ref, bifc_ref,
                 wf1s_ref, wf1i_ref, bf1_ref,
                 wf2_ref, bf2_ref, o_ref):
    f32, bf16 = jnp.float32, jnp.bfloat16
    h = jnp.maximum(jnp.dot(xs_ref[...], ws1_ref[...],
                            preferred_element_type=f32) + bs1_ref[...], 0.0)
    s_out = jnp.maximum(jnp.dot(h.astype(bf16), ws2_ref[...],
                                preferred_element_type=f32) + bs2_ref[...], 0.0)
    img = jnp.maximum(jnp.dot(xi_ref[...], wifc_ref[...],
                              preferred_element_type=f32) + bifc_ref[...], 0.0)
    # fusion Linear(96->64) with the weight split so no runtime concat is needed
    z = jnp.maximum(
        jnp.dot(s_out.astype(bf16), wf1s_ref[...], preferred_element_type=f32)
        + jnp.dot(img.astype(bf16), wf1i_ref[...], preferred_element_type=f32)
        + bf1_ref[...], 0.0)
    out = jnp.dot(z.astype(bf16), wf2_ref[...],
                  preferred_element_type=f32) + bf2_ref[...]   # (tm, 128) lane-dense
    o_ref[...] = out.astype(o_ref.dtype)


# ---------------------------------------------------------------------------
# Tiling plans
# ---------------------------------------------------------------------------
def _plan_batch(N, R, target=32):
    """Images per conv grid block (B) and zero-padded batch size (Np)."""
    align = max(1, 8 // math.gcd(R, 8))          # keep B*R a multiple of 8 sublanes
    nblk = max(1, -(-N // target))
    if nblk == 1 and N >= 2 * align:             # give both v7x TensorCores a block
        nblk = 2
    B = -(-N // nblk)
    B = -(-B // align) * align
    return B, nblk * B


def _head_tile(Np):
    """Head row tile: large (<=512), multiple of 8, >=2 blocks when possible."""
    if Np >= 1024:
        return 512
    if Np >= 16:
        return min(512, -(-((Np + 1) // 2) // 8) * 8)
    return Np


# ---------------------------------------------------------------------------
# Pallas-call wrappers
# ---------------------------------------------------------------------------
def conv_branch(image_nchw, kp, B):
    """(Np,C,H,W) -> (Np, (H//4)*(W//4)*32) bf16, NHWC-flatten feature order."""
    Np, C, H, W = image_nchw.shape
    R = H // 4
    half1 = (W // 2) * 16
    half2 = (W // 4) * 32
    t1, b1, t2, b2 = kp['c1_t'], kp['c1_b'], kp['c2_t'], kp['c2_b']

    # Single small XLA prep pass: NCHW->NHWC + bf16 cast + height-only pad,
    # then build the 4 overlapping 3-row groups the Toeplitz matmul consumes.
    x = jnp.transpose(image_nchw, (0, 2, 3, 1)).astype(jnp.bfloat16)
    xh = jnp.pad(x.reshape(Np, H, W * C), ((0, 0), (1, 1), (0, 0)))     # (Np,H+2,W*C)
    pieces = []
    for g in range(4):
        cols = [xh[:, g + d: g + d + 4 * R - 3: 4, :] for d in range(3)]
        pieces.append(jnp.concatenate(cols, axis=-1))                   # (Np,R,3*W*C)
    groups = jnp.stack(pieces, axis=0).reshape(4, Np * R, 3 * W * C)

    grid = (Np // B,)
    out = pl.pallas_call(
        functools.partial(_conv_fused_kernel, R=R, half1=half1, half2=half2),
        grid=grid,
        in_specs=[
            pl.BlockSpec((4, B * R, 3 * W * C), lambda n: (0, n, 0)),
            # weights/biases: constant index_map -> VMEM-resident across the grid.
            # NOTE: Toeplitz weights grow O(W^2 * Cin * Cout); tile their N dim
            # with an extra grid axis before running at much larger images.
            pl.BlockSpec(t1.shape, lambda n: (0, 0)),
            pl.BlockSpec(b1.shape, lambda n: (0, 0)),
            pl.BlockSpec(t2.shape, lambda n: (0, 0)),
            pl.BlockSpec(b2.shape, lambda n: (0, 0)),
        ],
        out_specs=pl.BlockSpec((B * R, half2), lambda n: (n, 0)),
        out_shape=jax.ShapeDtypeStruct((Np * R, half2), jnp.bfloat16),
        compiler_params=pltpu.CompilerParams(dimension_semantics=("parallel",)),
    )(groups, t1, b1, t2, b2)
    return out.reshape(Np, R * half2)          # free metadata reshape on HBM


def fused_head(xs, xi, kp):
    """xs: (Np,F) bf16 structured, xi: (Np,flat) bf16 image features."""
    Np, F = xs.shape
    Ki = xi.shape[1]
    ncp = kp['f2_w'].shape[1]                  # class dim padded to 128 lanes
    tm = _head_tile(Np)
    grid = (pl.cdiv(Np, tm),)

    weights = (kp['s1_w'], kp['s1_b'], kp['s2_w'], kp['s2_b'],
               kp['ifc_w'], kp['ifc_b'],
               kp['f1s_w'], kp['f1i_w'], kp['f1_b'],
               kp['f2_w'], kp['f2_b'])

    in_specs = ([pl.BlockSpec((tm, F), lambda i: (i, 0)),
                 pl.BlockSpec((tm, Ki), lambda i: (i, 0))]
                + [pl.BlockSpec(w.shape, lambda i: (0, 0)) for w in weights])

    return pl.pallas_call(
        _head_kernel,
        grid=grid,
        in_specs=in_specs,
        out_specs=pl.BlockSpec((tm, ncp), lambda i: (i, 0)),
        out_shape=jax.ShapeDtypeStruct((Np, ncp), jnp.float32),
        compiler_params=pltpu.CompilerParams(dimension_semantics=("parallel",)),
    )(xs, xi, *weights)


# ---------------------------------------------------------------------------
# Parameter init (PyTorch-style) + one-time host-side re-layout for kernels
# ---------------------------------------------------------------------------
def init_params(key, num_struct_features, image_input_shape, num_classes):
    C, H, W = image_input_shape

    def dense(k, fan_in, fan_out):
        kw, kb = jax.random.split(k)
        lim = 1.0 / np.sqrt(float(fan_in))
        return (jax.random.uniform(kw, (fan_in, fan_out), jnp.float32, -lim, lim),
                jax.random.uniform(kb, (fan_out,), jnp.float32, -lim, lim))

    def conv(k, cin, cout):
        kw, kb = jax.random.split(k)
        lim = 1.0 / np.sqrt(float(cin * 9))
        return (jax.random.uniform(kw, (3, 3, cin, cout), jnp.float32, -lim, lim),
                jax.random.uniform(kb, (cout,), jnp.float32, -lim, lim))

    ks = jax.random.split(key, 7)
    flat = 32 * (H // 4) * (W // 4)
    return dict(
        s1=dense(ks[0], num_struct_features, 64),
        s2=dense(ks[1], 64, 32),
        c1=conv(ks[2], C, 16),
        c2=conv(ks[3], 16, 32),
        ifc=dense(ks[4], flat, 64),      # rows in PyTorch NCHW-flatten order
        f1=dense(ks[5], 32 + 64, 64),
        f2=dense(ks[6], 64, num_classes),
    )


def _pool_toeplitz(w, W):
    """(3,3,Cin,Cout) conv weight -> (3*W*Cin, W*Cout) stacked Toeplitz.

    Rows are [dy=0 | dy=1 | dy=2] blocks of un-padded input-row columns
    (w_in*Cin + ci); width-pad columns are dropped (they are always zero).
    Output columns are ordered [even w_out | odd w_out] so the horizontal half
    of the 2x2 maxpool is a lane-half max inside the kernel."""
    w = np.asarray(w, np.float32)
    Cin, Cout = w.shape[2], w.shape[3]
    Wh = W // 2
    T = np.zeros((3 * W * Cin, W * Cout), np.float32)
    for dy in range(3):
        for parity in range(2):
            for wq in range(Wh):
                w_out = 2 * wq + parity
                c0 = parity * Wh * Cout + wq * Cout
                for dx in range(3):
                    w_in = w_out + dx - 1
                    if 0 <= w_in < W:
                        r0 = dy * W * Cin + w_in * Cin
                        T[r0:r0 + Cin, c0:c0 + Cout] = w[dy, dx]
    return T


def prepare_kernel_params(params, image_input_shape, num_classes):
    C, H, W = image_input_shape
    bf16 = jnp.bfloat16
    H2, W2, C2 = H // 4, W // 4, 32

    c1_w, c1_b = params['c1']
    c2_w, c2_b = params['c2']
    t1 = jnp.asarray(_pool_toeplitz(np.asarray(c1_w), W), bf16)
    t2 = jnp.asarray(_pool_toeplitz(np.asarray(c2_w), W // 2), bf16)
    b1 = jnp.tile(jnp.asarray(c1_b, jnp.float32)[None, :], (1, W // 2))   # (1,(W/2)*16)
    b2 = jnp.tile(jnp.asarray(c2_b, jnp.float32)[None, :], (1, W // 4))   # (1,(W/4)*32)

    # Image-FC weight: permute rows so the NHWC-order flatten produced by the
    # conv kernel maps onto a weight initialized in PyTorch's NCHW-flatten
    # row order (no runtime transpose).
    ifc_w, ifc_b = params['ifc']
    ifc_w = (ifc_w.reshape(C2, H2, W2, 64)
             .transpose(1, 2, 0, 3)
             .reshape(H2 * W2 * C2, 64))

    f1_w, f1_b = params['f1']            # (96,64): rows [0:32] structured, [32:96] image

    # Pad the classifier to a lane-dense 128-wide output (sliced outside).
    f2_w, f2_b = params['f2']
    ncp = max(128, -(-num_classes // 128) * 128)
    f2_wp = jnp.zeros((64, ncp), jnp.float32).at[:, :num_classes].set(f2_w)
    f2_bp = jnp.zeros((1, ncp), jnp.float32).at[0, :num_classes].set(f2_b)

    return dict(
        c1_t=t1, c1_b=b1, c2_t=t2, c2_b=b2,
        s1_w=params['s1'][0].astype(bf16), s1_b=params['s1'][1][None, :],
        s2_w=params['s2'][0].astype(bf16), s2_b=params['s2'][1][None, :],
        ifc_w=ifc_w.astype(bf16), ifc_b=ifc_b[None, :],
        f1s_w=f1_w[:32].astype(bf16), f1i_w=f1_w[32:].astype(bf16),
        f1_b=f1_b[None, :],
        f2_w=f2_wp.astype(bf16), f2_b=f2_bp,
    )


# ---------------------------------------------------------------------------
# Forward pass (mirrors MultimodalCNN.forward)
# ---------------------------------------------------------------------------
def multimodal_cnn(kp, structured_data, image_data_nchw, *, num_classes):
    N = structured_data.shape[0]
    _, C, H, W = image_data_nchw.shape
    R = H // 4
    B, Np = _plan_batch(N, R)
    if Np > N:                                           # zero-pad the batch
        image_data_nchw = jnp.pad(image_data_nchw,
                                  ((0, Np - N), (0, 0), (0, 0), (0, 0)))
        structured_data = jnp.pad(structured_data, ((0, Np - N), (0, 0)))

    img_feat = conv_branch(image_data_nchw, kp, B)       # (Np, (H/4)*(W/4)*32) bf16
    logits = fused_head(structured_data.astype(jnp.bfloat16), img_feat, kp)
    return logits[:N, :num_classes]


if __name__ == "__main__":
    key = jax.random.PRNGKey(0)
    kp_key, ks, ki = jax.random.split(key, 3)

    batch = 2
    num_struct_features = 8
    image_input_shape = (4, 16, 16)   # (C, H, W); H, W must be multiples of 4
    num_classes = 3

    params = init_params(kp_key, num_struct_features, image_input_shape, num_classes)
    kparams = prepare_kernel_params(params, image_input_shape, num_classes)

    structured = jax.random.normal(ks, (batch, num_struct_features), jnp.float32)
    image = jax.random.normal(ki, (batch,) + image_input_shape, jnp.float32)

    forward = jax.jit(functools.partial(multimodal_cnn, num_classes=num_classes))
    out = forward(kparams, structured, image)
    out = jax.block_until_ready(out)
    assert out.shape == (batch, num_classes)
    assert bool(jnp.all(jnp.isfinite(out)))
    print("KERNEL_OK")
</pallas_src>

<mosaic_0001>
module attributes {stable_mosaic.version = 11 : i64} {
  func.func @_conv_fused_kernel(%arg0: i32, %arg1: memref<4x8x192xbf16, #tpu.memory_space<vmem>>, %arg2: memref<192x256xbf16, #tpu.memory_space<vmem>>, %arg3: memref<1x128xf32, #tpu.memory_space<vmem>>, %arg4: memref<384x256xbf16, #tpu.memory_space<vmem>>, %arg5: memref<1x128xf32, #tpu.memory_space<vmem>>, %arg6: memref<8x128xbf16, #tpu.memory_space<vmem>>) attributes {dimension_semantics = [#tpu.dimension_semantics<parallel>], iteration_bounds = array<i64: 1>, scalar_prefetch = 0 : i64, scratch_operands = 0 : i64, tpu.core_type = #tpu.core_type<tc>, window_params = [{transform_indices = @transform_0, window_bounds = array<i64: 4, 8, 192>}, {pipeline_mode = #tpu.pipeline_mode<synchronous>, transform_indices = @transform_1, window_bounds = array<i64: 192, 256>}, {pipeline_mode = #tpu.pipeline_mode<synchronous>, transform_indices = @transform_2, window_bounds = array<i64: 1, 128>}, {pipeline_mode = #tpu.pipeline_mode<synchronous>, transform_indices = @transform_3, window_bounds = array<i64: 384, 256>}, {pipeline_mode = #tpu.pipeline_mode<synchronous>, transform_indices = @transform_4, window_bounds = array<i64: 1, 128>}, {transform_indices = @transform_5, window_bounds = array<i64: 8, 128>}]} {
    %c0 = arith.constant 0 : index
    %c0_0 = arith.constant 0 : index
    %0 = vector.load %arg2[%c0, %c0_0] : memref<192x256xbf16, #tpu.memory_space<vmem>>, vector<192x256xbf16>
    %c0_1 = arith.constant 0 : index
    %c0_2 = arith.constant 0 : index
    %c0_3 = arith.constant 0 : index
    %1 = vector.load %arg1[%c0_1, %c0_2, %c0_3] : memref<4x8x192xbf16, #tpu.memory_space<vmem>>, vector<1x8x192xbf16>
    %2 = vector.shape_cast %1 : vector<1x8x192xbf16> to vector<8x192xbf16>
    %cst = arith.constant dense<0.000000e+00> : vector<8x256xf32>
    %3 = tpu.matmul %2, %0, %cst {dimension_numbers = #tpu.dot_dimension_numbers<[1], [0], [0], [1], [0, 0, 1, 1], [], []>} : vector<8x192xbf16>, vector<192x256xbf16>, vector<8x256xf32> -> vector<8x256xf32>
    %c1 = arith.constant 1 : index
    %c0_4 = arith.constant 0 : index
    %c0_5 = arith.constant 0 : index
    %4 = vector.load %arg1[%c1, %c0_4, %c0_5] : memref<4x8x192xbf16, #tpu.memory_space<vmem>>, vector<1x8x192xbf16>
    %5 = vector.shape_cast %4 : vector<1x8x192xbf16> to vector<8x192xbf16>
    %cst_6 = arith.constant dense<0.000000e+00> : vector<8x256xf32>
    %6 = tpu.matmul %5, %0, %cst_6 {dimension_numbers = #tpu.dot_dimension_numbers<[1], [0], [0], [1], [0, 0, 1, 1], [], []>} : vector<8x192xbf16>, vector<192x256xbf16>, vector<8x256xf32> -> vector<8x256xf32>
    %c2 = arith.constant 2 : index
    %c0_7 = arith.constant 0 : index
    %c0_8 = arith.constant 0 : index
    %7 = vector.load %arg1[%c2, %c0_7, %c0_8] : memref<4x8x192xbf16, #tpu.memory_space<vmem>>, vector<1x8x192xbf16>
    %8 = vector.shape_cast %7 : vector<1x8x192xbf16> to vector<8x192xbf16>
    %cst_9 = arith.constant dense<0.000000e+00> : vector<8x256xf32>
    %9 = tpu.matmul %8, %0, %cst_9 {dimension_numbers = #tpu.dot_dimension_numbers<[1], [0], [0], [1], [0, 0, 1, 1], [], []>} : vector<8x192xbf16>, vector<192x256xbf16>, vector<8x256xf32> -> vector<8x256xf32>
    %c3 = arith.constant 3 : index
    %c0_10 = arith.constant 0 : index
    %c0_11 = arith.constant 0 : index
    %10 = vector.load %arg1[%c3, %c0_10, %c0_11] : memref<4x8x192xbf16, #tpu.memory_space<vmem>>, vector<1x8x192xbf16>
    %11 = vector.shape_cast %10 : vector<1x8x192xbf16> to vector<8x192xbf16>
    %cst_12 = arith.constant dense<0.000000e+00> : vector<8x256xf32>
    %12 = tpu.matmul %11, %0, %cst_12 {dimension_numbers = #tpu.dot_dimension_numbers<[1], [0], [0], [1], [0, 0, 1, 1], [], []>} : vector<8x192xbf16>, vector<192x256xbf16>, vector<8x256xf32> -> vector<8x256xf32>
    %13 = arith.maximumf %3, %6 : vector<8x256xf32>
    %14 = arith.maximumf %9, %12 : vector<8x256xf32>
    %15 = vector.extract_strided_slice %13 {offsets = [0, 0], sizes = [8, 128], strides = [1, 1]} : vector<8x256xf32> to vector<8x128xf32>
    %16 = vector.extract_strided_slice %13 {offsets = [0, 128], sizes = [8, 128], strides = [1, 1]} : vector<8x256xf32> to vector<8x128xf32>
    %17 = arith.maximumf %15, %16 : vector<8x128xf32>
    %c0_13 = arith.constant 0 : index
    %c0_14 = arith.constant 0 : index
    %18 = vector.load %arg3[%c0_13, %c0_14] : memref<1x128xf32, #tpu.memory_space<vmem>>, vector<1x128xf32>
    %19 = vector.broadcast %18 : vector<1x128xf32> to vector<8x128xf32>
    %20 = arith.addf %17, %19 : vector<8x128xf32>
    %cst_15 = arith.constant 0.000000e+00 : f32
    %21 = vector.broadcast %cst_15 : f32 to vector<8x128xf32>
    %22 = arith.maximumf %20, %21 : vector<8x128xf32>
    %23 = vector.extract_strided_slice %14 {offsets = [0, 0], sizes = [8, 128], strides = [1, 1]} : vector<8x256xf32> to vector<8x128xf32>
    %24 = vector.extract_strided_slice %14 {offsets = [0, 128], sizes = [8, 128], strides = [1, 1]} : vector<8x256xf32> to vector<8x128xf32>
    %25 = arith.maximumf %23, %24 : vector<8x128xf32>
    %c0_16 = arith.constant 0 : index
    %c0_17 = arith.constant 0 : index
    %26 = vector.load %arg3[%c0_16, %c0_17] : memref<1x128xf32, #tpu.memory_space<vmem>>, vector<1x128xf32>
    %27 = vector.broadcast %26 : vector<1x128xf32> to vector<8x128xf32>
    %28 = arith.addf %25, %27 : vector<8x128xf32>
    %cst_18 = arith.constant 0.000000e+00 : f32
    %29 = vector.broadcast %cst_18 : f32 to vector<8x128xf32>
    %30 = arith.maximumf %28, %29 : vector<8x128xf32>
    %31 = tpu.iota {dimensions = array<i32: 0>} : vector<8x128xi32>
    %cst_19 = arith.constant 0.000000e+00 : f32
    %32 = vector.broadcast %cst_19 : f32 to vector<1x128xf32>
    %c4_i32 = arith.constant 4 : i32
    %c0_i32 = arith.constant 0 : i32
    %33 = arith.cmpi eq, %c4_i32, %c0_i32 : i32
    %c1_i32 = arith.constant 1 : i32
    %34 = arith.select %33, %c1_i32, %c4_i32 : i32
    %35 = vector.broadcast %34 : i32 to vector<8x128xi32>
    %36 = arith.remsi %31, %35 : vector<8x128xi32>
    %c0_i32_20 = arith.constant 0 : i32
    %37 = vector.broadcast %c0_i32_20 : i32 to vector<8x128xi32>
    %38 = arith.cmpi ne, %36, %37 : vector<8x128xi32>
    %c0_i32_21 = arith.constant 0 : i32
    %39 = vector.broadcast %c0_i32_21 : i32 to vector<8x128xi32>
    %40 = arith.cmpi slt, %36, %39 : vector<8x128xi32>
    %c0_i32_22 = arith.constant 0 : i32
    %41 = arith.cmpi slt, %34, %c0_i32_22 : i32
    %42 = vector.broadcast %41 : i1 to vector<8x128xi1>
    %43 = vector.broadcast %42 : vector<8x128xi1> to vector<8x128xi1>
    %44 = arith.xori %40, %43 : vector<8x128xi1>
    %45 = arith.andi %44, %38 : vector<8x128xi1>
    %46 = vector.broadcast %34 : i32 to vector<8x128xi32>
    %47 = arith.addi %36, %46 : vector<8x128xi32>
    %48 = arith.select %45, %47, %36 : vector<8x128xi1>, vector<8x128xi32>
    %c0_i32_23 = arith.constant 0 : i32
    %49 = vector.broadcast %c0_i32_23 : i32 to vector<8x128xi32>
    %50 = arith.cmpi eq, %48, %49 : vector<8x128xi32>
    %51 = vector.extract_strided_slice %30 {offsets = [0, 0], sizes = [7, 128], strides = [1, 1]} : vector<8x128xf32> to vector<7x128xf32>
    %52 = tpu.concatenate %32, %51 in 0 : vector<1x128xf32>, vector<7x128xf32> -> vector<8x128xf32>
    %cst_24 = arith.constant 0.000000e+00 : f32
    %53 = vector.broadcast %cst_24 : f32 to vector<8x128xf32>
    %54 = arith.select %50, %53, %52 : vector<8x128xi1>, vector<8x128xf32>
    %c4_i32_25 = arith.constant 4 : i32
    %c0_i32_26 = arith.constant 0 : i32
    %55 = arith.cmpi eq, %c4_i32_25, %c0_i32_26 : i32
    %c1_i32_27 = arith.constant 1 : i32
    %56 = arith.select %55, %c1_i32_27, %c4_i32_25 : i32
    %57 = vector.broadcast %56 : i32 to vector<8x128xi32>
    %58 = arith.remsi %31, %57 : vector<8x128xi32>
    %c0_i32_28 = arith.constant 0 : i32
    %59 = vector.broadcast %c0_i32_28 : i32 to vector<8x128xi32>
    %60 = arith.cmpi ne, %58, %59 : vector<8x128xi32>
    %c0_i32_29 = arith.constant 0 : i32
    %61 = vector.broadcast %c0_i32_29 : i32 to vector<8x128xi32>
    %62 = arith.cmpi slt, %58, %61 : vector<8x128xi32>
    %c0_i32_30 = arith.constant 0 : i32
    %63 = arith.cmpi slt, %56, %c0_i32_30 : i32
    %64 = vector.broadcast %63 : i1 to vector<8x128xi1>
    %65 = vector.broadcast %64 : vector<8x128xi1> to vector<8x128xi1>
    %66 = arith.xori %62, %65 : vector<8x128xi1>
    %67 = arith.andi %66, %60 : vector<8x128xi1>
    %68 = vector.broadcast %56 : i32 to vector<8x128xi32>
    %69 = arith.addi %58, %68 : vector<8x128xi32>
    %70 = arith.select %67, %69, %58 : vector<8x128xi1>, vector<8x128xi32>
    %c3_i32 = arith.constant 3 : i32
    %71 = vector.broadcast %c3_i32 : i32 to vector<8x128xi32>
    %72 = arith.cmpi eq, %70, %71 : vector<8x128xi32>
    %73 = vector.extract_strided_slice %22 {offsets = [1, 0], sizes = [7, 128], strides = [1, 1]} : vector<8x128xf32> to vector<7x128xf32>
    %74 = tpu.concatenate %73, %32 in 0 : vector<7x128xf32>, vector<1x128xf32> -> vector<8x128xf32>
    %cst_31 = arith.constant 0.000000e+00 : f32
    %75 = vector.broadcast %cst_31 : f32 to vector<8x128xf32>
    %76 = arith.select %72, %75, %74 : vector<8x128xi1>, vector<8x128xf32>
    %77 = tpu.concatenate %54, %22, %30 in 1 : vector<8x128xf32>, vector<8x128xf32>, vector<8x128xf32> -> vector<8x384xf32>
    %78 = arith.truncf %77 : vector<8x384xf32> to vector<8x384xbf16>
    %79 = tpu.concatenate %22, %30, %76 in 1 : vector<8x128xf32>, vector<8x128xf32>, vector<8x128xf32> -> vector<8x384xf32>
    %80 = arith.truncf %79 : vector<8x384xf32> to vector<8x384xbf16>
    %c0_32 = arith.constant 0 : index
    %c0_33 = arith.constant 0 : index
    %81 = vector.load %arg4[%c0_32, %c0_33] : memref<384x256xbf16, #tpu.memory_space<vmem>>, vector<384x256xbf16>
    %cst_34 = arith.constant dense<0.000000e+00> : vector<8x256xf32>
    %82 = tpu.matmul %78, %81, %cst_34 {dimension_numbers = #tpu.dot_dimension_numbers<[1], [0], [0], [1], [0, 0, 1, 1], [], []>} : vector<8x384xbf16>, vector<384x256xbf16>, vector<8x256xf32> -> vector<8x256xf32>
    %cst_35 = arith.constant dense<0.000000e+00> : vector<8x256xf32>
    %83 = tpu.matmul %80, %81, %cst_35 {dimension_numbers = #tpu.dot_dimension_numbers<[1], [0], [0], [1], [0, 0, 1, 1], [], []>} : vector<8x384xbf16>, vector<384x256xbf16>, vector<8x256xf32> -> vector<8x256xf32>
    %84 = arith.maximumf %82, %83 : vector<8x256xf32>
    %85 = vector.extract_strided_slice %84 {offsets = [0, 0], sizes = [8, 128], strides = [1, 1]} : vector<8x256xf32> to vector<8x128xf32>
    %86 = vector.extract_strided_slice %84 {offsets = [0, 128], sizes = [8, 128], strides = [1, 1]} : vector<8x256xf32> to vector<8x128xf32>
    %87 = arith.maximumf %85, %86 : vector<8x128xf32>
    %c0_36 = arith.constant 0 : index
    %c0_37 = arith.constant 0 : index
    %88 = vector.load %arg5[%c0_36, %c0_37] : memref<1x128xf32, #tpu.memory_space<vmem>>, vector<1x128xf32>
    %89 = vector.broadcast %88 : vector<1x128xf32> to vector<8x128xf32>
    %90 = arith.addf %87, %89 : vector<8x128xf32>
    %cst_38 = arith.constant 0.000000e+00 : f32
    %91 = vector.broadcast %cst_38 : f32 to vector<8x128xf32>
    %92 = arith.maximumf %90, %91 : vector<8x128xf32>
    %93 = arith.truncf %92 : vector<8x128xf32> to vector<8x128xbf16>
    %c0_39 = arith.constant 0 : index
    %c0_40 = arith.constant 0 : index
    %94 = vector.load %arg6[%c0_39, %c0_40] : memref<8x128xbf16, #tpu.memory_space<vmem>>, vector<8x128xbf16>
    tpu.vector_store %arg6[%c0_39, %c0_40], %93 {strides = array<i32>} : memref<8x128xbf16, #tpu.memory_space<vmem>>, vector<8x128xbf16>,
    return
  }
  func.func @transform_0(%arg0: i32) -> (i32, i32, i32) {
    %c0_i32 = arith.constant 0 : i32
    %c0_i32_0 = arith.constant 0 : i32
    %c0_i32_1 = arith.constant 0 : i32
    return %c0_i32, %arg0, %c0_i32_0 : i32, i32, i32
  }
  func.func @transform_1(%arg0: i32) -> (i32, i32) {
    %c0_i32 = arith.constant 0 : i32
    %c0_i32_0 = arith.constant 0 : i32
    %c0_i32_1 = arith.constant 0 : i32
    return %c0_i32, %c0_i32_0 : i32, i32
  }
  func.func @transform_2(%arg0: i32) -> (i32, i32) {
    %c0_i32 = arith.constant 0 : i32
    %c0_i32_0 = arith.constant 0 : i32
    %c0_i32_1 = arith.constant 0 : i32
    return %c0_i32, %c0_i32_0 : i32, i32
  }
  func.func @transform_3(%arg0: i32) -> (i32, i32) {
    %c0_i32 = arith.constant 0 : i32
    %c0_i32_0 = arith.constant 0 : i32
    %c0_i32_1 = arith.constant 0 : i32
    return %c0_i32, %c0_i32_0 : i32, i32
  }
  func.func @transform_4(%arg0: i32) -> (i32, i32) {
    %c0_i32 = arith.constant 0 : i32
    %c0_i32_0 = arith.constant 0 : i32
    %c0_i32_1 = arith.constant 0 : i32
    return %c0_i32, %c0_i32_0 : i32, i32
  }
  func.func @transform_5(%arg0: i32) -> (i32, i32) {
    %c0_i32 = arith.constant 0 : i32
    %c0_i32_0 = arith.constant 0 : i32
    return %arg0, %c0_i32 : i32, i32
  }
}

module attributes {stable_mosaic.version = 11 : i64} {
  func.func @_head_kernel(%arg0: i32, %arg1: memref<2x8xbf16, #tpu.memory_space<vmem>>, %arg2: memref<2x512xbf16, #tpu.memory_space<vmem>>, %arg3: memref<8x64xbf16, #tpu.memory_space<vmem>>, %arg4: memref<1x64xf32, #tpu.memory_space<vmem>>, %arg5: memref<64x32xbf16, #tpu.memory_space<vmem>>, %arg6: memref<1x32xf32, #tpu.memory_space<vmem>>, %arg7: memref<512x64xbf16, #tpu.memory_space<vmem>>, %arg8: memref<1x64xf32, #tpu.memory_space<vmem>>, %arg9: memref<32x64xbf16, #tpu.memory_space<vmem>>, %arg10: memref<64x64xbf16, #tpu.memory_space<vmem>>, %arg11: memref<1x64xf32, #tpu.memory_space<vmem>>, %arg12: memref<64x128xbf16, #tpu.memory_space<vmem>>, %arg13: memref<1x128xf32, #tpu.memory_space<vmem>>, %arg14: memref<2x128xf32, #tpu.memory_space<vmem>>) attributes {dimension_semantics = [#tpu.dimension_semantics<parallel>], iteration_bounds = array<i64: 1>, scalar_prefetch = 0 : i64, scratch_operands = 0 : i64, tpu.core_type = #tpu.core_type<tc>, window_params = [{transform_indices = @transform_0, window_bounds = array<i64: 2, 8>}, {transform_indices = @transform_1, window_bounds = array<i64: 2, 512>}, {pipeline_mode = #tpu.pipeline_mode<synchronous>, transform_indices = @transform_2, window_bounds = array<i64: 8, 64>}, {pipeline_mode = #tpu.pipeline_mode<synchronous>, transform_indices = @transform_3, window_bounds = array<i64: 1, 64>}, {pipeline_mode = #tpu.pipeline_mode<synchronous>, transform_indices = @transform_4, window_bounds = array<i64: 64, 32>}, {pipeline_mode = #tpu.pipeline_mode<synchronous>, transform_indices = @transform_5, window_bounds = array<i64: 1, 32>}, {pipeline_mode = #tpu.pipeline_mode<synchronous>, transform_indices = @transform_6, window_bounds = array<i64: 512, 64>}, {pipeline_mode = #tpu.pipeline_mode<synchronous>, transform_indices = @transform_7, window_bounds = array<i64: 1, 64>}, {pipeline_mode = #tpu.pipeline_mode<synchronous>, transform_indices = @transform_8, window_bounds = array<i64: 32, 64>}, {pipeline_mode = #tpu.pipeline_mode<synchronous>, transform_indices = @transform_9, window_bounds = array<i64: 64, 64>}, {pipeline_mode = #tpu.pipeline_mode<synchronous>, transform_indices = @transform_10, window_bounds = array<i64: 1, 64>}, {pipeline_mode = #tpu.pipeline_mode<synchronous>, transform_indices = @transform_11, window_bounds = array<i64: 64, 128>}, {pipeline_mode = #tpu.pipeline_mode<synchronous>, transform_indices = @transform_12, window_bounds = array<i64: 1, 128>}, {transform_indices = @transform_13, window_bounds = array<i64: 2, 128>}]} {
    %c0 = arith.constant 0 : index
    %c0_0 = arith.constant 0 : index
    %0 = vector.load %arg1[%c0, %c0_0] : memref<2x8xbf16, #tpu.memory_space<vmem>>, vector<2x8xbf16>
    %c0_1 = arith.constant 0 : index
    %c0_2 = arith.constant 0 : index
    %1 = vector.load %arg3[%c0_1, %c0_2] : memref<8x64xbf16, #tpu.memory_space<vmem>>, vector<8x64xbf16>
    %cst = arith.constant dense<0.000000e+00> : vector<2x64xf32>
    %2 = tpu.matmul %0, %1, %cst {dimension_numbers = #tpu.dot_dimension_numbers<[1], [0], [0], [1], [0, 0, 1, 1], [], []>} : vector<2x8xbf16>, vector<8x64xbf16>, vector<2x64xf32> -> vector<2x64xf32>
    %c0_3 = arith.constant 0 : index
    %c0_4 = arith.constant 0 : index
    %3 = vector.load %arg4[%c0_3, %c0_4] : memref<1x64xf32, #tpu.memory_space<vmem>>, vector<1x64xf32>
    %4 = vector.broadcast %3 : vector<1x64xf32> to vector<2x64xf32>
    %5 = arith.addf %2, %4 : vector<2x64xf32>
    %cst_5 = arith.constant 0.000000e+00 : f32
    %6 = vector.broadcast %cst_5 : f32 to vector<2x64xf32>
    %7 = arith.maximumf %5, %6 : vector<2x64xf32>
    %8 = arith.truncf %7 : vector<2x64xf32> to vector<2x64xbf16>
    %c0_6 = arith.constant 0 : index
    %c0_7 = arith.constant 0 : index
    %9 = vector.load %arg5[%c0_6, %c0_7] : memref<64x32xbf16, #tpu.memory_space<vmem>>, vector<64x32xbf16>
    %cst_8 = arith.constant dense<0.000000e+00> : vector<2x32xf32>
    %10 = tpu.matmul %8, %9, %cst_8 {dimension_numbers = #tpu.dot_dimension_numbers<[1], [0], [0], [1], [0, 0, 1, 1], [], []>} : vector<2x64xbf16>, vector<64x32xbf16>, vector<2x32xf32> -> vector<2x32xf32>
    %c0_9 = arith.constant 0 : index
    %c0_10 = arith.constant 0 : index
    %11 = vector.load %arg6[%c0_9, %c0_10] : memref<1x32xf32, #tpu.memory_space<vmem>>, vector<1x32xf32>
    %12 = vector.broadcast %11 : vector<1x32xf32> to vector<2x32xf32>
    %13 = arith.addf %10, %12 : vector<2x32xf32>
    %cst_11 = arith.constant 0.000000e+00 : f32
    %14 = vector.broadcast %cst_11 : f32 to vector<2x32xf32>
    %15 = arith.maximumf %13, %14 : vector<2x32xf32>
    %c0_12 = arith.constant 0 : index
    %c0_13 = arith.constant 0 : index
    %16 = vector.load %arg2[%c0_12, %c0_13] : memref<2x512xbf16, #tpu.memory_space<vmem>>, vector<2x512xbf16>
    %c0_14 = arith.constant 0 : index
    %c0_15 = arith.constant 0 : index
    %17 = vector.load %arg7[%c0_14, %c0_15] : memref<512x64xbf16, #tpu.memory_space<vmem>>, vector<512x64xbf16>
    %cst_16 = arith.constant dense<0.000000e+00> : vector<2x64xf32>
    %18 = tpu.matmul %16, %17, %cst_16 {dimension_numbers = #tpu.dot_dimension_numbers<[1], [0], [0], [1], [0, 0, 1, 1], [], []>} : vector<2x512xbf16>, vector<512x64xbf16>, vector<2x64xf32> -> vector<2x64xf32>
    %c0_17 = arith.constant 0 : index
    %c0_18 = arith.constant 0 : index
    %19 = vector.load %arg8[%c0_17, %c0_18] : memref<1x64xf32, #tpu.memory_space<vmem>>, vector<1x64xf32>
    %20 = vector.broadcast %19 : vector<1x64xf32> to vector<2x64xf32>
    %21 = arith.addf %18, %20 : vector<2x64xf32>
    %cst_19 = arith.constant 0.000000e+00 : f32
    %22 = vector.broadcast %cst_19 : f32 to vector<2x64xf32>
    %23 = arith.maximumf %21, %22 : vector<2x64xf32>
    %24 = arith.truncf %15 : vector<2x32xf32> to vector<2x32xbf16>
    %c0_20 = arith.constant 0 : index
    %c0_21 = arith.constant 0 : index
    %25 = vector.load %arg9[%c0_20, %c0_21] : memref<32x64xbf16, #tpu.memory_space<vmem>>, vector<32x64xbf16>
    %cst_22 = arith.constant dense<0.000000e+00> : vector<2x64xf32>
    %26 = tpu.matmul %24, %25, %cst_22 {dimension_numbers = #tpu.dot_dimension_numbers<[1], [0], [0], [1], [0, 0, 1, 1], [], []>} : vector<2x32xbf16>, vector<32x64xbf16>, vector<2x64xf32> -> vector<2x64xf32>
    %27 = arith.truncf %23 : vector<2x64xf32> to vector<2x64xbf16>
    %c0_23 = arith.constant 0 : index
    %c0_24 = arith.constant 0 : index
    %28 = vector.load %arg10[%c0_23, %c0_24] : memref<64x64xbf16, #tpu.memory_space<vmem>>, vector<64x64xbf16>
    %cst_25 = arith.constant dense<0.000000e+00> : vector<2x64xf32>
    %29 = tpu.matmul %27, %28, %cst_25 {dimension_numbers = #tpu.dot_dimension_numbers<[1], [0], [0], [1], [0, 0, 1, 1], [], []>} : vector<2x64xbf16>, vector<64x64xbf16>, vector<2x64xf32> -> vector<2x64xf32>
    %30 = arith.addf %26, %29 : vector<2x64xf32>
    %c0_26 = arith.constant 0 : index
    %c0_27 = arith.constant 0 : index
    %31 = vector.load %arg11[%c0_26, %c0_27] : memref<1x64xf32, #tpu.memory_space<vmem>>, vector<1x64xf32>
    %32 = vector.broadcast %31 : vector<1x64xf32> to vector<2x64xf32>
    %33 = arith.addf %30, %32 : vector<2x64xf32>
    %cst_28 = arith.constant 0.000000e+00 : f32
    %34 = vector.broadcast %cst_28 : f32 to vector<2x64xf32>
    %35 = arith.maximumf %33, %34 : vector<2x64xf32>
    %36 = arith.truncf %35 : vector<2x64xf32> to vector<2x64xbf16>
    %c0_29 = arith.constant 0 : index
    %c0_30 = arith.constant 0 : index
    %37 = vector.load %arg12[%c0_29, %c0_30] : memref<64x128xbf16, #tpu.memory_space<vmem>>, vector<64x128xbf16>
    %cst_31 = arith.constant dense<0.000000e+00> : vector<2x128xf32>
    %38 = tpu.matmul %36, %37, %cst_31 {dimension_numbers = #tpu.dot_dimension_numbers<[1], [0], [0], [1], [0, 0, 1, 1], [], []>} : vector<2x64xbf16>, vector<64x128xbf16>, vector<2x128xf32> -> vector<2x128xf32>
    %c0_32 = arith.constant 0 : index
    %c0_33 = arith.constant 0 : index
    %39 = vector.load %arg13[%c0_32, %c0_33] : memref<1x128xf32, #tpu.memory_space<vmem>>, vector<1x128xf32>
    %40 = vector.broadcast %39 : vector<1x128xf32> to vector<2x128xf32>
    %41 = arith.addf %38, %40 : vector<2x128xf32>
    %c0_34 = arith.constant 0 : index
    %c0_35 = arith.constant 0 : index
    %42 = vector.load %arg14[%c0_34, %c0_35] : memref<2x128xf32, #tpu.memory_space<vmem>>, vector<2x128xf32>
    tpu.vector_store %arg14[%c0_34, %c0_35], %41 {strides = array<i32>} : memref<2x128xf32, #tpu.memory_space<vmem>>, vector<2x128xf32>,
    return
  }
  func.func @transform_0(%arg0: i32) -> (i32, i32) {
    %c0_i32 = arith.constant 0 : i32
    %c0_i32_0 = arith.constant 0 : i32
    return %arg0, %c0_i32 : i32, i32
  }
  func.func @transform_1(%arg0: i32) -> (i32, i32) {
    %c0_i32 = arith.constant 0 : i32
    %c0_i32_0 = arith.constant 0 : i32
    return %arg0, %c0_i32 : i32, i32
  }
  func.func @transform_2(%arg0: i32) -> (i32, i32) {
    %c0_i32 = arith.constant 0 : i32
    %c0_i32_0 = arith.constant 0 : i32
    %c0_i32_1 = arith.constant 0 : i32
    return %c0_i32, %c0_i32_0 : i32, i32
  }
  func.func @transform_3(%arg0: i32) -> (i32, i32) {
    %c0_i32 = arith.constant 0 : i32
    %c0_i32_0 = arith.constant 0 : i32
    %c0_i32_1 = arith.constant 0 : i32
    return %c0_i32, %c0_i32_0 : i32, i32
  }
  func.func @transform_4(%arg0: i32) -> (i32, i32) {
    %c0_i32 = arith.constant 0 : i32
    %c0_i32_0 = arith.constant 0 : i32
    %c0_i32_1 = arith.constant 0 : i32
    return %c0_i32, %c0_i32_0 : i32, i32
  }
  func.func @transform_5(%arg0: i32) -> (i32, i32) {
    %c0_i32 = arith.constant 0 : i32
    %c0_i32_0 = arith.constant 0 : i32
    %c0_i32_1 = arith.constant 0 : i32
    return %c0_i32, %c0_i32_0 : i32, i32
  }
  func.func @transform_6(%arg0: i32) -> (i32, i32) {
    %c0_i32 = arith.constant 0 : i32
    %c0_i32_0 = arith.constant 0 : i32
    %c0_i32_1 = arith.constant 0 : i32
    return %c0_i32, %c0_i32_0 : i32, i32
  }
  func.func @transform_7(%arg0: i32) -> (i32, i32) {
    %c0_i32 = arith.constant 0 : i32
    %c0_i32_0 = arith.constant 0 : i32
    %c0_i32_1 = arith.constant 0 : i32
    return %c0_i32, %c0_i32_0 : i32, i32
  }
  func.func @transform_8(%arg0: i32) -> (i32, i32) {
    %c0_i32 = arith.constant 0 : i32
    %c0_i32_0 = arith.constant 0 : i32
    %c0_i32_1 = arith.constant 0 : i32
    return %c0_i32, %c0_i32_0 : i32, i32
  }
  func.func @transform_9(%arg0: i32) -> (i32, i32) {
    %c0_i32 = arith.constant 0 : i32
    %c0_i32_0 = arith.constant 0 : i32
    %c0_i32_1 = arith.constant 0 : i32
    return %c0_i32, %c0_i32_0 : i32, i32
  }
  func.func @transform_10(%arg0: i32) -> (i32, i32) {
    %c0_i32 = arith.constant 0 : i32
    %c0_i32_0 = arith.constant 0 : i32
    %c0_i32_1 = arith.constant 0 : i32
    return %c0_i32, %c0_i32_0 : i32, i32
  }
  func.func @transform_11(%arg0: i32) -> (i32, i32) {
    %c0_i32 = arith.constant 0 : i32
    %c0_i32_0 = arith.constant 0 : i32
    %c0_i32_1 = arith.constant 0 : i32
    return %c0_i32, %c0_i32_0 : i32, i32
  }
  func.func @transform_12(%arg0: i32) -> (i32, i32) {
    %c0_i32 = arith.constant 0 : i32
    %c0_i32_0 = arith.constant 0 : i32
    %c0_i32_1 = arith.constant 0 : i32
    return %c0_i32, %c0_i32_0 : i32, i32
  }
  func.func @transform_13(%arg0: i32) -> (i32, i32) {
    %c0_i32 = arith.constant 0 : i32
    %c0_i32_0 = arith.constant 0 : i32
    return %arg0, %c0_i32 : i32, i32
  }
}

</mosaic_0001>

<llo_original>
// kernel: multimodal_cnn.2
$region0: #{multimodal_cnn.2}
  #allocation0 [shape = 'u32[]', space=smem, size = 0x4, offset = 0x4, fixed_abs, tag = 'smem constant byte address 0x4 - core index']
  #allocation1 [shape = 'u32[144,128]{1,0:T(1,128)}', space=vmem, size = 0x12000, scoped, tag = 'internal scratch']
  %s0 = inlined_call_operand.vmem [shape: bf16[4,8,192], index: 0, kind: input, shape index: {}]
  %s1 = inlined_call_operand.vmem [shape: bf16[192,256], index: 1, kind: input, shape index: {}]
  %s2 = inlined_call_operand.vmem [shape: f32[1,128], index: 2, kind: input, shape index: {}]
  %s3 = inlined_call_operand.vmem [shape: bf16[384,256], index: 3, kind: input, shape index: {}]
  %s4 = inlined_call_operand.vmem [shape: f32[1,128], index: 4, kind: input, shape index: {}]
  %s5 = inlined_call_operand.vmem [shape: bf16[8,128], index: 5, kind: output, shape index: {}]
  %s6 = sld [smem:[#allocation0]]
  $region30: #{multimodal_cnn.2} parent=0
    _
  %s8 = ssub.s32 1, %s6
  %s9 = scalar_select 0, %s8, %s6
  // Predicated region
  $region2: #{multimodal_cnn.2} parent=0 // pred_check
    _
  $region3: #{multimodal_cnn.2} parent=0 // pred_check_branch
    %11 = sbr.rel (0) target = $region5
  $region4: #{multimodal_cnn.2} parent=0 // pred_region
    _
  $region5: #{multimodal_cnn.2} parent=0 // pred_fallthru
    _
  // Predicated region
  $region6: #{multimodal_cnn.2} parent=0 // pred_check
    _
  $region7: #{multimodal_cnn.2} parent=0 // pred_check_branch
    %13 = sbr.rel (0) target = $region9
  $region8: #{multimodal_cnn.2} parent=0 // pred_region
    _
  $region9: #{multimodal_cnn.2} parent=0 // pred_fallthru
    _
  // Predicated region
  $region10: #{multimodal_cnn.2} parent=0 // pred_check
    _
  $region11: #{multimodal_cnn.2} parent=0 // pred_check_branch
    %15 = sbr.rel (0) target = $region13
  $region12: #{multimodal_cnn.2} parent=0 // pred_region
    _
  $region13: #{multimodal_cnn.2} parent=0 // pred_fallthru
    _
  // Predicated region
  $region14: #{multimodal_cnn.2} parent=0 // pred_check
    _
  $region15: #{multimodal_cnn.2} parent=0 // pred_check_branch
    %17 = sbr.rel (0) target = $region17
  $region16: #{multimodal_cnn.2} parent=0 // pred_region
    _
  $region17: #{multimodal_cnn.2} parent=0 // pred_fallthru
    _
  // Predicated region
  $region18: #{multimodal_cnn.2} parent=0 // pred_check
    _
  $region19: #{multimodal_cnn.2} parent=0 // pred_check_branch
    %19 = sbr.rel (0) target = $region21
  $region20: #{multimodal_cnn.2} parent=0 // pred_region
    _
  $region21: #{multimodal_cnn.2} parent=0 // pred_fallthru
    _
  %v21 = vld [vmem:[%s1] sm:$0xff]
  %v22 = vld [vmem:[%s1 + $0x8] sm:$0xff]
  %v23 = vld [vmem:[%s1 + $0x10] sm:$0xff]
  %v24 = vld [vmem:[%s1 + $0x18] sm:$0xff]
  %v25 = vld [vmem:[%s1 + $0x20] sm:$0xff]
  %v26 = vld [vmem:[%s1 + $0x28] sm:$0xff]
  %v27 = vld [vmem:[%s1 + $0x30] sm:$0xff]
  %v28 = vld [vmem:[%s1 + $0x38] sm:$0xff]
  %v29 = vld [vmem:[%s1 + $0x40] sm:$0xff]
  %v30 = vld [vmem:[%s1 + $0x48] sm:$0xff]
  %v31 = vld [vmem:[%s1 + $0x50] sm:$0xff]
  %v32 = vld [vmem:[%s1 + $0x58] sm:$0xff]
  %v33 = vld [vmem:[%s1 + $0x60] sm:$0xff]
  %v34 = vld [vmem:[%s1 + $0x68] sm:$0xff]
  %v35 = vld [vmem:[%s1 + $0x70] sm:$0xff]
  %v36 = vld [vmem:[%s1 + $0x78] sm:$0xff]
  %v37 = vld [vmem:[%s1 + $0x80] sm:$0xff]
  %v38 = vld [vmem:[%s1 + $0x88] sm:$0xff]
  %v39 = vld [vmem:[%s1 + $0x90] sm:$0xff]
  %v40 = vld [vmem:[%s1 + $0x98] sm:$0xff]
  %v41 = vld [vmem:[%s1 + $0xa0] sm:$0xff]
  %v42 = vld [vmem:[%s1 + $0xa8] sm:$0xff]
  %v43 = vld [vmem:[%s1 + $0xb0] sm:$0xff]
  %v44 = vld [vmem:[%s1 + $0xb8] sm:$0xff]
  %v45 = vld [vmem:[%s0] sm:$0xff]
  %v47 = vunpack.c.l.b16 %v45
  %v48 = vunpack.c.h.b16 %v45
  %v49 = vpack.c.b16 %v47, %v47
  %v50 = vpack.c.b16 %v48, %v48
  %v76 = vunpack.c.l.b16 %v21
  %v77 = vunpack.c.h.b16 %v21
  %v78 = vunpack.c.l.b16 %v22
  %v79 = vunpack.c.h.b16 %v22
  %v80 = vunpack.c.l.b16 %v23
  %v81 = vunpack.c.h.b16 %v23
  %v82 = vunpack.c.l.b16 %v24
  %v83 = vunpack.c.h.b16 %v24
  %v84 = vunpack.c.l.b16 %v25
  %v85 = vunpack.c.h.b16 %v25
  %v86 = vunpack.c.l.b16 %v26
  %v87 = vunpack.c.h.b16 %v26
  %v88 = vunpack.c.l.b16 %v27
  %v89 = vunpack.c.h.b16 %v27
  %v90 = vunpack.c.l.b16 %v28
  %v91 = vunpack.c.h.b16 %v28
  %v92 = vunpack.c.l.b16 %v29
  %v93 = vunpack.c.h.b16 %v29
  %v94 = vunpack.c.l.b16 %v30
  %v95 = vunpack.c.h.b16 %v30
  %v96 = vunpack.c.l.b16 %v31
  %v97 = vunpack.c.h.b16 %v31
  %v98 = vunpack.c.l.b16 %v32
  %v99 = vunpack.c.h.b16 %v32
  %v100 = vunpack.c.l.b16 %v33
  %v101 = vunpack.c.h.b16 %v33
  %v102 = vunpack.c.l.b16 %v34
  %v103 = vunpack.c.h.b16 %v34
  %v104 = vunpack.c.l.b16 %v35
  %v105 = vunpack.c.h.b16 %v35
  %v106 = vunpack.c.l.b16 %v36
  %v107 = vunpack.c.h.b16 %v36
  %v108 = vunpack.c.l.b16 %v37
  %v109 = vunpack.c.h.b16 %v37
  %v110 = vunpack.c.l.b16 %v38
  %v111 = vunpack.c.h.b16 %v38
  %v112 = vunpack.c.l.b16 %v39
  %v113 = vunpack.c.h.b16 %v39
  %v114 = vunpack.c.l.b16 %v40
  %v115 = vunpack.c.h.b16 %v40
  %v116 = vunpack.c.l.b16 %v41
  %v117 = vunpack.c.h.b16 %v41
  %v118 = vunpack.c.l.b16 %v42
  %v119 = vunpack.c.h.b16 %v42
  %v120 = vunpack.c.l.b16 %v43
  %v121 = vunpack.c.h.b16 %v43
  %v122 = vunpack.c.l.b16 %v44
  %v123 = vunpack.c.h.b16 %v44
  %v124 = vpack.c.b16 %v78, %v76
  %v125 = vpack.c.b16 %v79, %v77
  %v126 = vpack.c.b16 %v82, %v80
  %v127 = vpack.c.b16 %v83, %v81
  %v128 = vpack.c.b16 %v86, %v84
  %v129 = vpack.c.b16 %v87, %v85
  %v130 = vpack.c.b16 %v90, %v88
  %v131 = vpack.c.b16 %v91, %v89
  %v132 = vpack.c.b16 %v94, %v92
  %v133 = vpack.c.b16 %v95, %v93
  %v134 = vpack.c.b16 %v98, %v96
  %v135 = vpack.c.b16 %v99, %v97
  %v136 = vpack.c.b16 %v102, %v100
  %v137 = vpack.c.b16 %v103, %v101
  %v138 = vpack.c.b16 %v106, %v104
  %v139 = vpack.c.b16 %v107, %v105
  %v140 = vpack.c.b16 %v110, %v108
  %v141 = vpack.c.b16 %v111, %v109
  %v142 = vpack.c.b16 %v114, %v112
  %v143 = vpack.c.b16 %v115, %v113
  %v144 = vpack.c.b16 %v118, %v116
  %v145 = vpack.c.b16 %v119, %v117
  %v146 = vpack.c.b16 %v122, %v120
  %v147 = vpack.c.b16 %v123, %v121
  %vm172 = vcmask 523264
  %v174 = vsel %vm172, %v50, 0
  %176 = vmatprep.subr.bf16.mxu0 %v125
  %177 = vmatpush1.bf16.msra.mxu0 %v124
  %178 = vmatprep.subr.bf16.mxu0 %v127
  %179 = vmatpush1.bf16.msra.mxu0 %v126
  %180 = vmatprep.subr.bf16.mxu0 %v129
  %181 = vmatpush1.bf16.msra.mxu0 %v128
  %182 = vmatprep.subr.bf16.mxu0 %v131
  %183 = vmatpush1.bf16.msra.mxu0 %v130
  %184 = vmatprep.subr.bf16.mxu0 %v133
  %185 = vmatpush1.bf16.msra.mxu0 %v132
  %186 = vmatprep.subr.bf16.mxu0 %v135
  %187 = vmatpush1.bf16.msra.mxu0 %v134
  %188 = vmatprep.subr.bf16.mxu0 %v137
  %189 = vmatpush1.bf16.msra.mxu0 %v136
  %190 = vmatprep.subr.bf16.mxu0 %v139
  %191 = vmatpush1.bf16.msra.mxu0 %v138
  %192 = vmatprep.subr.bf16.mxu0 %v141
  %193 = vmatpush1.bf16.msra.mxu0 %v140
  %194 = vmatprep.subr.bf16.mxu0 %v143
  %195 = vmatpush1.bf16.msra.mxu0 %v142
  %196 = vmatprep.subr.bf16.mxu0 %v145
  %197 = vmatpush1.bf16.msra.mxu0 %v144
  %198 = vmatprep.subr.bf16.mxu0 %v147
  %199 = vmatpush1.bf16.msra.mxu0 %v146
  %200 = vmatprep.subr.bf16.mxu0 0
  %201 = vmatpush1.bf16.msra.mxu0 0
  %202 = vmatprep.subr.bf16.mxu0 0
  %203 = vmatpush1.bf16.msra.mxu0 0
  %204 = vmatprep.subr.bf16.mxu0 0
  %205 = vmatpush1.bf16.msra.mxu0 0
  %206 = vmatprep.subr.bf16.mxu0 0
  %207 = vmatpush1.bf16.msra.mxu0 0
  %208 = vmatprep.mubr.bf16.mxu0 %v174
  %209 = vmatmul.mubr.bf16.gmra.mrb[0].mxu0 %v49
  %v210 = vpop.f32.mrb[0].mxu0
  %v211 = vadd.f32 0.0, %v210
  %v212 = vpop.f32.mrb[0].mxu0
  %v213 = vadd.f32 0.0, %v212
  %v214 = vpop.f32.mrb[0].mxu0
  %v215 = vpop.f32.mrb[0].mxu0
  %216 = vdwg.mxu0
  %s217 = scalar_lea.vmem %s0, 8
  %v218 = vld [vmem:[%s217] sm:$0xff]
  %v220 = vunpack.c.l.b16 %v218
  %v221 = vunpack.c.h.b16 %v218
  %v222 = vpack.c.b16 %v220, %v220
  %v223 = vpack.c.b16 %v221, %v221
  %v226 = vsel %vm172, %v223, 0
  %228 = vmatprep.subr.bf16.mxu0 %v125
  %229 = vmatpush1.bf16.msra.mxu0 %v124
  %230 = vmatprep.subr.bf16.mxu0 %v127
  %231 = vmatpush1.bf16.msra.mxu0 %v126
  %232 = vmatprep.subr.bf16.mxu0 %v129
  %233 = vmatpush1.bf16.msra.mxu0 %v128
  %234 = vmatprep.subr.bf16.mxu0 %v131
  %235 = vmatpush1.bf16.msra.mxu0 %v130
  %236 = vmatprep.subr.bf16.mxu0 %v133
  %237 = vmatpush1.bf16.msra.mxu0 %v132
  %238 = vmatprep.subr.bf16.mxu0 %v135
  %239 = vmatpush1.bf16.msra.mxu0 %v134
  %240 = vmatprep.subr.bf16.mxu0 %v137
  %241 = vmatpush1.bf16.msra.mxu0 %v136
  %242 = vmatprep.subr.bf16.mxu0 %v139
  %243 = vmatpush1.bf16.msra.mxu0 %v138
  %244 = vmatprep.subr.bf16.mxu0 %v141
  %245 = vmatpush1.bf16.msra.mxu0 %v140
  %246 = vmatprep.subr.bf16.mxu0 %v143
  %247 = vmatpush1.bf16.msra.mxu0 %v142
  %248 = vmatprep.subr.bf16.mxu0 %v145
  %249 = vmatpush1.bf16.msra.mxu0 %v144
  %250 = vmatprep.subr.bf16.mxu0 %v147
  %251 = vmatpush1.bf16.msra.mxu0 %v146
  %252 = vmatprep.subr.bf16.mxu0 0
  %253 = vmatpush1.bf16.msra.mxu0 0
  %254 = vmatprep.subr.bf16.mxu0 0
  %255 = vmatpush1.bf16.msra.mxu0 0
  %256 = vmatprep.subr.bf16.mxu0 0
  %257 = vmatpush1.bf16.msra.mxu0 0
  %258 = vmatprep.subr.bf16.mxu0 0
  %259 = vmatpush1.bf16.msra.mxu0 0
  %260 = vmatprep.mubr.bf16.mxu0 %v226
  %261 = vmatmul.mubr.bf16.gmra.mrb[0].mxu0 %v222
  %v262 = vpop.f32.mrb[0].mxu0
  %v263 = vadd.f32 0.0, %v262
  %v264 = vpop.f32.mrb[0].mxu0
  %v265 = vadd.f32 0.0, %v264
  %v266 = vpop.f32.mrb[0].mxu0
  %v267 = vpop.f32.mrb[0].mxu0
  %268 = vdwg.mxu0
  %s269 = scalar_lea.vmem %s0, 16
  %v270 = vld [vmem:[%s269] sm:$0xff]
  %v272 = vunpack.c.l.b16 %v270
  %v273 = vunpack.c.h.b16 %v270
  %v274 = vpack.c.b16 %v272, %v272
  %v275 = vpack.c.b16 %v273, %v273
  %v278 = vsel %vm172, %v275, 0
  %280 = vmatprep.subr.bf16.mxu0 %v125
  %281 = vmatpush1.bf16.msra.mxu0 %v124
  %282 = vmatprep.subr.bf16.mxu0 %v127
  %283 = vmatpush1.bf16.msra.mxu0 %v126
  %284 = vmatprep.subr.bf16.mxu0 %v129
  %285 = vmatpush1.bf16.msra.mxu0 %v128
  %286 = vmatprep.subr.bf16.mxu0 %v131
  %287 = vmatpush1.bf16.msra.mxu0 %v130
  %288 = vmatprep.subr.bf16.mxu0 %v133
  %289 = vmatpush1.bf16.msra.mxu0 %v132
  %290 = vmatprep.subr.bf16.mxu0 %v135
  %291 = vmatpush1.bf16.msra.mxu0 %v134
  %292 = vmatprep.subr.bf16.mxu0 %v137
  %293 = vmatpush1.bf16.msra.mxu0 %v136
  %294 = vmatprep.subr.bf16.mxu0 %v139
  %295 = vmatpush1.bf16.msra.mxu0 %v138
  %296 = vmatprep.subr.bf16.mxu0 %v141
  %297 = vmatpush1.bf16.msra.mxu0 %v140
  %298 = vmatprep.subr.bf16.mxu0 %v143
  %299 = vmatpush1.bf16.msra.mxu0 %v142
  %300 = vmatprep.subr.bf16.mxu0 %v145
  %301 = vmatpush1.bf16.msra.mxu0 %v144
  %302 = vmatprep.subr.bf16.mxu0 %v147
  %303 = vmatpush1.bf16.msra.mxu0 %v146
  %304 = vmatprep.subr.bf16.mxu0 0
  %305 = vmatpush1.bf16.msra.mxu0 0
  %306 = vmatprep.subr.bf16.mxu0 0
  %307 = vmatpush1.bf16.msra.mxu0 0
  %308 = vmatprep.subr.bf16.mxu0 0
  %309 = vmatpush1.bf16.msra.mxu0 0
  %310 = vmatprep.subr.bf16.mxu0 0
  %311 = vmatpush1.bf16.msra.mxu0 0
  %312 = vmatprep.mubr.bf16.mxu0 %v278
  %313 = vmatmul.mubr.bf16.gmra.mrb[0].mxu0 %v274
  %v314 = vpop.f32.mrb[0].mxu0
  %v315 = vadd.f32 0.0, %v314
  %v316 = vpop.f32.mrb[0].mxu0
  %v317 = vadd.f32 0.0, %v316
  %v318 = vpop.f32.mrb[0].mxu0
  %v319 = vpop.f32.mrb[0].mxu0
  %320 = vdwg.mxu0
  %s321 = scalar_lea.vmem %s0, 24
  %v322 = vld [vmem:[%s321] sm:$0xff]
  %v324 = vunpack.c.l.b16 %v322
  %v325 = vunpack.c.h.b16 %v322
  %v326 = vpack.c.b16 %v324, %v324
  %v327 = vpack.c.b16 %v325, %v325
  %v330 = vsel %vm172, %v327, 0
  %332 = vmatprep.subr.bf16.mxu0 %v125
  %333 = vmatpush1.bf16.msra.mxu0 %v124
  %334 = vmatprep.subr.bf16.mxu0 %v127
  %335 = vmatpush1.bf16.msra.mxu0 %v126
  %336 = vmatprep.subr.bf16.mxu0 %v129
  %337 = vmatpush1.bf16.msra.mxu0 %v128
  %338 = vmatprep.subr.bf16.mxu0 %v131
  %339 = vmatpush1.bf16.msra.mxu0 %v130
  %340 = vmatprep.subr.bf16.mxu0 %v133
  %341 = vmatpush1.bf16.msra.mxu0 %v132
  %342 = vmatprep.subr.bf16.mxu0 %v135
  %343 = vmatpush1.bf16.msra.mxu0 %v134
  %344 = vmatprep.subr.bf16.mxu0 %v137
  %345 = vmatpush1.bf16.msra.mxu0 %v136
  %346 = vmatprep.subr.bf16.mxu0 %v139
  %347 = vmatpush1.bf16.msra.mxu0 %v138
  %348 = vmatprep.subr.bf16.mxu0 %v141
  %349 = vmatpush1.bf16.msra.mxu0 %v140
  %350 = vmatprep.subr.bf16.mxu0 %v143
  %351 = vmatpush1.bf16.msra.mxu0 %v142
  %352 = vmatprep.subr.bf16.mxu0 %v145
  %353 = vmatpush1.bf16.msra.mxu0 %v144
  %354 = vmatprep.subr.bf16.mxu0 %v147
  %355 = vmatpush1.bf16.msra.mxu0 %v146
  %356 = vmatprep.subr.bf16.mxu0 0
  %357 = vmatpush1.bf16.msra.mxu0 0
  %358 = vmatprep.subr.bf16.mxu0 0
  %359 = vmatpush1.bf16.msra.mxu0 0
  %360 = vmatprep.subr.bf16.mxu0 0
  %361 = vmatpush1.bf16.msra.mxu0 0
  %362 = vmatprep.subr.bf16.mxu0 0
  %363 = vmatpush1.bf16.msra.mxu0 0
  %364 = vmatprep.mubr.bf16.mxu0 %v330
  %365 = vmatmul.mubr.bf16.gmra.mrb[0].mxu0 %v326
  %v366 = vpop.f32.mrb[0].mxu0
  %v367 = vadd.f32 0.0, %v366
  %v368 = vpop.f32.mrb[0].mxu0
  %v369 = vadd.f32 0.0, %v368
  %v370 = vpop.f32.mrb[0].mxu0
  %v371 = vpop.f32.mrb[0].mxu0
  %372 = vdwg.mxu0
  %v373 = vmax.f32 %v211, %v263
  %v374 = vmax.f32 %v213, %v265
  %v375 = vmax.f32 %v315, %v367
  %v376 = vmax.f32 %v317, %v369
  %v377 = vmax.f32 %v373, %v374
  %v378 = vld [vmem:[%s2] sm:$0x1]
  %v380 = vlaneseq
  %v381 = vshrl.u32 %v380, 7
  %v382 = vsub.s32 0, %v381
  %v383 = vrot.slane %v378, %v382
  %v385 = vadd.f32 %v377, %v383
  %v386 = vmax.f32 %v385, 0.0
  %v387 = vmax.f32 %v375, %v376
  %v388 = vadd.f32 %v387, %v383
  %v389 = vmax.f32 %v388, 0.0
  %v390 = vlaneseq
  %v391 = vshrl.u32 %v390, 7
  %vm392 = vcmp.lt.s32.totalorder %v391, 0
  %v393 = vsub.s32 0, %v391
  %v394 = vsel %vm392, %v393, %v391
  %v395 = vshrl.u32 %v394, 2
  %v396 = vand.u32 %v394, 3
  %v397 = vsub.s32 0, %v396
  %v398 = vsel %vm392, %v397, %v396
  %vm399 = vcmp.ne.s32.totalorder %v398, 0
  %vm400 = vcmp.lt.s32.totalorder %v398, 0
  %vm401 = vmand %vm400, %vm399
  %v402 = vadd.s32 %v398, 4
  %v403 = vsel %vm401, %v402, %v398
  %vm404 = vcmp.eq.s32.totalorder %v403, 0
  %v406 = vrot.slane %v389, 7
  %vm408 = vcmask 1040384
  %v409 = vsel %vm408, 0.0, %v406
  %v410 = vsel %vm404, 0.0, %v409
  %vm411 = vcmp.eq.s32.totalorder %v403, 3
  %v413 = vrot.slane %v386, 1
  %vm415 = vcmask 1046528
  %v416 = vsel %vm415, %v413, 0.0
  %v417 = vsel %vm411, 0.0, %v416
  %v418 = vpack.c.bf16 %v410, %v410
  %v419 = vpack.c.bf16 %v386, %v386
  %v420 = vpack.c.bf16 %v389, %v389
  %v421 = vpack.c.bf16 %v417, %v417
  %v422 = vld [vmem:[%s3] sm:$0xff]
  %v423 = vld [vmem:[%s3 + $0x8] sm:$0xff]
  %v424 = vld [vmem:[%s3 + $0x10] sm:$0xff]
  %v425 = vld [vmem:[%s3 + $0x18] sm:$0xff]
  %v426 = vld [vmem:[%s3 + $0x20] sm:$0xff]
  %v427 = vld [vmem:[%s3 + $0x28] sm:$0xff]
  %v428 = vld [vmem:[%s3 + $0x30] sm:$0xff]
  %v429 = vld [vmem:[%s3 + $0x38] sm:$0xff]
  %v430 = vld [vmem:[%s3 + $0x40] sm:$0xff]
  %v431 = vld [vmem:[%s3 + $0x48] sm:$0xff]
  %v432 = vld [vmem:[%s3 + $0x50] sm:$0xff]
  %v433 = vld [vmem:[%s3 + $0x58] sm:$0xff]
  %v434 = vld [vmem:[%s3 + $0x60] sm:$0xff]
  %v435 = vld [vmem:[%s3 + $0x68] sm:$0xff]
  %v436 = vld [vmem:[%s3 + $0x70] sm:$0xff]
  %v437 = vld [vmem:[%s3 + $0x78] sm:$0xff]
  %v438 = vld [vmem:[%s3 + $0x80] sm:$0xff]
  %v439 = vld [vmem:[%s3 + $0x88] sm:$0xff]
  %v440 = vld [vmem:[%s3 + $0x90] sm:$0xff]
  %v441 = vld [vmem:[%s3 + $0x98] sm:$0xff]
  %v442 = vld [vmem:[%s3 + $0xa0] sm:$0xff]
  %v443 = vld [vmem:[%s3 + $0xa8] sm:$0xff]
  %v444 = vld [vmem:[%s3 + $0xb0] sm:$0xff]
  %v445 = vld [vmem:[%s3 + $0xb8] sm:$0xff]
  %v446 = vld [vmem:[%s3 + $0xc0] sm:$0xff]
  %v447 = vld [vmem:[%s3 + $0xc8] sm:$0xff]
  %v448 = vld [vmem:[%s3 + $0xd0] sm:$0xff]
  %v449 = vld [vmem:[%s3 + $0xd8] sm:$0xff]
  %v450 = vld [vmem:[%s3 + $0xe0] sm:$0xff]
  %v451 = vld [vmem:[%s3 + $0xe8] sm:$0xff]
  %v452 = vld [vmem:[%s3 + $0xf0] sm:$0xff]
  %v453 = vld [vmem:[%s3 + $0xf8] sm:$0xff]
  %v454 = vld [vmem:[%s3 + $0x100] sm:$0xff]
  %v455 = vld [vmem:[%s3 + $0x108] sm:$0xff]
  %v456 = vld [vmem:[%s3 + $0x110] sm:$0xff]
  %v457 = vld [vmem:[%s3 + $0x118] sm:$0xff]
  %v458 = vld [vmem:[%s3 + $0x120] sm:$0xff]
  %v459 = vld [vmem:[%s3 + $0x128] sm:$0xff]
  %v460 = vld [vmem:[%s3 + $0x130] sm:$0xff]
  %v461 = vld [vmem:[%s3 + $0x138] sm:$0xff]
  %v462 = vld [vmem:[%s3 + $0x140] sm:$0xff]
  %v463 = vld [vmem:[%s3 + $0x148] sm:$0xff]
  %v464 = vld [vmem:[%s3 + $0x150] sm:$0xff]
  %v465 = vld [vmem:[%s3 + $0x158] sm:$0xff]
  %v466 = vld [vmem:[%s3 + $0x160] sm:$0xff]
  %v467 = vld [vmem:[%s3 + $0x168] sm:$0xff]
  %v468 = vld [vmem:[%s3 + $0x170] sm:$0xff]
  %v469 = vld [vmem:[%s3 + $0x178] sm:$0xff]
  %v518 = vunpack.c.l.b16 %v422
  %v519 = vunpack.c.h.b16 %v422
  %v520 = vunpack.c.l.b16 %v423
  %v521 = vunpack.c.h.b16 %v423
  %v522 = vunpack.c.l.b16 %v424
  %v523 = vunpack.c.h.b16 %v424
  %v524 = vunpack.c.l.b16 %v425
  %v525 = vunpack.c.h.b16 %v425
  %v526 = vunpack.c.l.b16 %v426
  %v527 = vunpack.c.h.b16 %v426
  %v528 = vunpack.c.l.b16 %v427
  %v529 = vunpack.c.h.b16 %v427
  %v530 = vunpack.c.l.b16 %v428
  %v531 = vunpack.c.h.b16 %v428
  %v532 = vunpack.c.l.b16 %v429
  %v533 = vunpack.c.h.b16 %v429
  %v534 = vunpack.c.l.b16 %v430
  %v535 = vunpack.c.h.b16 %v430
  %v536 = vunpack.c.l.b16 %v431
  %v537 = vunpack.c.h.b16 %v431
  %v538 = vunpack.c.l.b16 %v432
  %v539 = vunpack.c.h.b16 %v432
  %v540 = vunpack.c.l.b16 %v433
  %v541 = vunpack.c.h.b16 %v433
  %v542 = vunpack.c.l.b16 %v434
  %v543 = vunpack.c.h.b16 %v434
  %v544 = vunpack.c.l.b16 %v435
  %v545 = vunpack.c.h.b16 %v435
  %v546 = vunpack.c.l.b16 %v436
  %v547 = vunpack.c.h.b16 %v436
  %v548 = vunpack.c.l.b16 %v437
  %v549 = vunpack.c.h.b16 %v437
  %v550 = vunpack.c.l.b16 %v438
  %v551 = vunpack.c.h.b16 %v438
  %v552 = vunpack.c.l.b16 %v439
  %v553 = vunpack.c.h.b16 %v439
  %v554 = vunpack.c.l.b16 %v440
  %v555 = vunpack.c.h.b16 %v440
  %v556 = vunpack.c.l.b16 %v441
  %v557 = vunpack.c.h.b16 %v441
  %v558 = vunpack.c.l.b16 %v442
  %v559 = vunpack.c.h.b16 %v442
  %v560 = vunpack.c.l.b16 %v443
  %v561 = vunpack.c.h.b16 %v443
  %v562 = vunpack.c.l.b16 %v444
  %v563 = vunpack.c.h.b16 %v444
  %v564 = vunpack.c.l.b16 %v445
  %v565 = vunpack.c.h.b16 %v445
  %v566 = vunpack.c.l.b16 %v446
  %v567 = vunpack.c.h.b16 %v446
  %v568 = vunpack.c.l.b16 %v447
  %v569 = vunpack.c.h.b16 %v447
  %v570 = vunpack.c.l.b16 %v448
  %v571 = vunpack.c.h.b16 %v448
  %v572 = vunpack.c.l.b16 %v449
  %v573 = vunpack.c.h.b16 %v449
  %v574 = vunpack.c.l.b16 %v450
  %v575 = vunpack.c.h.b16 %v450
  %v576 = vunpack.c.l.b16 %v451
  %v577 = vunpack.c.h.b16 %v451
  %v578 = vunpack.c.l.b16 %v452
  %v579 = vunpack.c.h.b16 %v452
  %v580 = vunpack.c.l.b16 %v453
  %v581 = vunpack.c.h.b16 %v453
  %v582 = vunpack.c.l.b16 %v454
  %v583 = vunpack.c.h.b16 %v454
  %v584 = vunpack.c.l.b16 %v455
  %v585 = vunpack.c.h.b16 %v455
  %v586 = vunpack.c.l.b16 %v456
  %v587 = vunpack.c.h.b16 %v456
  %v588 = vunpack.c.l.b16 %v457
  %v589 = vunpack.c.h.b16 %v457
  %v590 = vunpack.c.l.b16 %v458
  %v591 = vunpack.c.h.b16 %v458
  %v592 = vunpack.c.l.b16 %v459
  %v593 = vunpack.c.h.b16 %v459
  %v594 = vunpack.c.l.b16 %v460
  %v595 = vunpack.c.h.b16 %v460
  %v596 = vunpack.c.l.b16 %v461
  %v597 = vunpack.c.h.b16 %v461
  %v598 = vunpack.c.l.b16 %v462
  %v599 = vunpack.c.h.b16 %v462
  %v600 = vunpack.c.l.b16 %v463
  %v601 = vunpack.c.h.b16 %v463
  %v602 = vunpack.c.l.b16 %v464
  %v603 = vunpack.c.h.b16 %v464
  %v604 = vunpack.c.l.b16 %v465
  %v605 = vunpack.c.h.b16 %v465
  %v606 = vunpack.c.l.b16 %v466
  %v607 = vunpack.c.h.b16 %v466
  %v608 = vunpack.c.l.b16 %v467
  %v609 = vunpack.c.h.b16 %v467
  %v610 = vunpack.c.l.b16 %v468
  %v611 = vunpack.c.h.b16 %v468
  %v612 = vunpack.c.l.b16 %v469
  %v613 = vunpack.c.h.b16 %v469
  %v614 = vpack.c.b16 %v520, %v518
  %v615 = vpack.c.b16 %v521, %v519
  %v616 = vpack.c.b16 %v524, %v522
  %v617 = vpack.c.b16 %v525, %v523
  %v618 = vpack.c.b16 %v528, %v526
  %v619 = vpack.c.b16 %v529, %v527
  %v620 = vpack.c.b16 %v532, %v530
  %v621 = vpack.c.b16 %v533, %v531
  %v622 = vpack.c.b16 %v536, %v534
  %v623 = vpack.c.b16 %v537, %v535
  %v624 = vpack.c.b16 %v540, %v538
  %v625 = vpack.c.b16 %v541, %v539
  %v626 = vpack.c.b16 %v544, %v542
  %v627 = vpack.c.b16 %v545, %v543
  %v628 = vpack.c.b16 %v548, %v546
  %v629 = vpack.c.b16 %v549, %v547
  %v630 = vpack.c.b16 %v552, %v550
  %v631 = vpack.c.b16 %v553, %v551
  %v632 = vpack.c.b16 %v556, %v554
  %v633 = vpack.c.b16 %v557, %v555
  %v634 = vpack.c.b16 %v560, %v558
  %v635 = vpack.c.b16 %v561, %v559
  %v636 = vpack.c.b16 %v564, %v562
  %v637 = vpack.c.b16 %v565, %v563
  %v638 = vpack.c.b16 %v568, %v566
  %v639 = vpack.c.b16 %v569, %v567
  %v640 = vpack.c.b16 %v572, %v570
  %v641 = vpack.c.b16 %v573, %v571
  %v642 = vpack.c.b16 %v576, %v574
  %v643 = vpack.c.b16 %v577, %v575
  %v644 = vpack.c.b16 %v580, %v578
  %v645 = vpack.c.b16 %v581, %v579
  %v646 = vpack.c.b16 %v584, %v582
  %v647 = vpack.c.b16 %v585, %v583
  %v648 = vpack.c.b16 %v588, %v586
  %v649 = vpack.c.b16 %v589, %v587
  %v650 = vpack.c.b16 %v592, %v590
  %v651 = vpack.c.b16 %v593, %v591
  %v652 = vpack.c.b16 %v596, %v594
  %v653 = vpack.c.b16 %v597, %v595
  %v654 = vpack.c.b16 %v600, %v598
  %v655 = vpack.c.b16 %v601, %v599
  %v656 = vpack.c.b16 %v604, %v602
  %v657 = vpack.c.b16 %v605, %v603
  %v658 = vpack.c.b16 %v608, %v606
  %v659 = vpack.c.b16 %v609, %v607
  %v660 = vpack.c.b16 %v612, %v610
  %v661 = vpack.c.b16 %v613, %v611
  %710 = vmatprep.subr.bf16.mxu0 %v615
  %711 = vmatpush1.bf16.msra.mxu0 %v614
  %712 = vmatprep.subr.bf16.mxu0 %v617
  %713 = vmatpush1.bf16.msra.mxu0 %v616
  %714 = vmatprep.subr.bf16.mxu0 %v619
  %715 = vmatpush1.bf16.msra.mxu0 %v618
  %716 = vmatprep.subr.bf16.mxu0 %v621
  %717 = vmatpush1.bf16.msra.mxu0 %v620
  %718 = vmatprep.subr.bf16.mxu0 %v623
  %719 = vmatpush1.bf16.msra.mxu0 %v622
  %720 = vmatprep.subr.bf16.mxu0 %v625
  %721 = vmatpush1.bf16.msra.mxu0 %v624
  %722 = vmatprep.subr.bf16.mxu0 %v627
  %723 = vmatpush1.bf16.msra.mxu0 %v626
  %724 = vmatprep.subr.bf16.mxu0 %v629
  %725 = vmatpush1.bf16.msra.mxu0 %v628
  %726 = vmatprep.subr.bf16.mxu0 %v631
  %727 = vmatpush1.bf16.msra.mxu0 %v630
  %728 = vmatprep.subr.bf16.mxu0 %v633
  %729 = vmatpush1.bf16.msra.mxu0 %v632
  %730 = vmatprep.subr.bf16.mxu0 %v635
  %731 = vmatpush1.bf16.msra.mxu0 %v634
  %732 = vmatprep.subr.bf16.mxu0 %v637
  %733 = vmatpush1.bf16.msra.mxu0 %v636
  %734 = vmatprep.subr.bf16.mxu0 %v639
  %735 = vmatpush1.bf16.msra.mxu0 %v638
  %736 = vmatprep.subr.bf16.mxu0 %v641
  %737 = vmatpush1.bf16.msra.mxu0 %v640
  %738 = vmatprep.subr.bf16.mxu0 %v643
  %739 = vmatpush1.bf16.msra.mxu0 %v642
  %740 = vmatprep.subr.bf16.mxu0 %v645
  %741 = vmatpush1.bf16.msra.mxu0 %v644
  %742 = vmatprep.mubr.bf16.mxu0 %v419
  %743 = vmatmul.mubr.bf16.gmra.mrb[0].mxu0 %v418
  %v744 = vpop.f32.mrb[0].mxu0
  %v745 = vadd.f32 0.0, %v744
  %v746 = vpop.f32.mrb[0].mxu0
  %v747 = vadd.f32 0.0, %v746
  %v748 = vpop.f32.mrb[0].mxu0
  %v749 = vpop.f32.mrb[0].mxu0
  %750 = vdwg.mxu0
  %751 = vmatprep.subr.bf16.mxu0 %v647
  %752 = vmatpush1.bf16.msra.mxu0 %v646
  %753 = vmatprep.subr.bf16.mxu0 %v649
  %754 = vmatpush1.bf16.msra.mxu0 %v648
  %755 = vmatprep.subr.bf16.mxu0 %v651
  %756 = vmatpush1.bf16.msra.mxu0 %v650
  %757 = vmatprep.subr.bf16.mxu0 %v653
  %758 = vmatpush1.bf16.msra.mxu0 %v652
  %759 = vmatprep.subr.bf16.mxu0 %v655
  %760 = vmatpush1.bf16.msra.mxu0 %v654
  %761 = vmatprep.subr.bf16.mxu0 %v657
  %762 = vmatpush1.bf16.msra.mxu0 %v656
  %763 = vmatprep.subr.bf16.mxu0 %v659
  %764 = vmatpush1.bf16.msra.mxu0 %v658
  %765 = vmatprep.subr.bf16.mxu0 %v661
  %766 = vmatpush1.bf16.msra.mxu0 %v660
  %767 = vmatprep.subr.bf16.mxu0 0
  %768 = vmatpush1.bf16.msra.mxu0 0
  %769 = vmatprep.subr.bf16.mxu0 0
  %770 = vmatpush1.bf16.msra.mxu0 0
  %771 = vmatprep.subr.bf16.mxu0 0
  %772 = vmatpush1.bf16.msra.mxu0 0
  %773 = vmatprep.subr.bf16.mxu0 0
  %774 = vmatpush1.bf16.msra.mxu0 0
  %775 = vmatprep.subr.bf16.mxu0 0
  %776 = vmatpush1.bf16.msra.mxu0 0
  %777 = vmatprep.subr.bf16.mxu0 0
  %778 = vmatpush1.bf16.msra.mxu0 0
  %779 = vmatprep.subr.bf16.mxu0 0
  %780 = vmatpush1.bf16.msra.mxu0 0
  %781 = vmatprep.subr.bf16.mxu0 0
  %782 = vmatpush1.bf16.msra.mxu0 0
  %783 = vmatprep.mubr.bf16.mxu0 0
  %784 = vmatmul.mubr.bf16.gmra.mrb[0].mxu0 %v420
  %v785 = vpop.f32.mrb[0].mxu0
  %v786 = vadd.f32 %v745, %v785
  %v787 = vpop.f32.mrb[0].mxu0
  %v788 = vadd.f32 %v747, %v787
  %v789 = vpop.f32.mrb[0].mxu0
  %v790 = vpop.f32.mrb[0].mxu0
  %791 = vdwg.mxu0
  %792 = vmatprep.subr.bf16.mxu0 %v615
  %793 = vmatpush1.bf16.msra.mxu0 %v614
  %794 = vmatprep.subr.bf16.mxu0 %v617
  %795 = vmatpush1.bf16.msra.mxu0 %v616
  %796 = vmatprep.subr.bf16.mxu0 %v619
  %797 = vmatpush1.bf16.msra.mxu0 %v618
  %798 = vmatprep.subr.bf16.mxu0 %v621
  %799 = vmatpush1.bf16.msra.mxu0 %v620
  %800 = vmatprep.subr.bf16.mxu0 %v623
  %801 = vmatpush1.bf16.msra.mxu0 %v622
  %802 = vmatprep.subr.bf16.mxu0 %v625
  %803 = vmatpush1.bf16.msra.mxu0 %v624
  %804 = vmatprep.subr.bf16.mxu0 %v627
  %805 = vmatpush1.bf16.msra.mxu0 %v626
  %806 = vmatprep.subr.bf16.mxu0 %v629
  %807 = vmatpush1.bf16.msra.mxu0 %v628
  %808 = vmatprep.subr.bf16.mxu0 %v631
  %809 = vmatpush1.bf16.msra.mxu0 %v630
  %810 = vmatprep.subr.bf16.mxu0 %v633
  %811 = vmatpush1.bf16.msra.mxu0 %v632
  %812 = vmatprep.subr.bf16.mxu0 %v635
  %813 = vmatpush1.bf16.msra.mxu0 %v634
  %814 = vmatprep.subr.bf16.mxu0 %v637
  %815 = vmatpush1.bf16.msra.mxu0 %v636
  %816 = vmatprep.subr.bf16.mxu0 %v639
  %817 = vmatpush1.bf16.msra.mxu0 %v638
  %818 = vmatprep.subr.bf16.mxu0 %v641
  %819 = vmatpush1.bf16.msra.mxu0 %v640
  %820 = vmatprep.subr.bf16.mxu0 %v643
  %821 = vmatpush1.bf16.msra.mxu0 %v642
  %822 = vmatprep.subr.bf16.mxu0 %v645
  %823 = vmatpush1.bf16.msra.mxu0 %v644
  %824 = vmatprep.mubr.bf16.mxu0 %v420
  %825 = vmatmul.mubr.bf16.gmra.mrb[0].mxu0 %v419
  %v826 = vpop.f32.mrb[0].mxu0
  %v827 = vadd.f32 0.0, %v826
  %v828 = vpop.f32.mrb[0].mxu0
  %v829 = vadd.f32 0.0, %v828
  %v830 = vpop.f32.mrb[0].mxu0
  %v831 = vpop.f32.mrb[0].mxu0
  %832 = vdwg.mxu0
  %833 = vmatprep.subr.bf16.mxu0 %v647
  %834 = vmatpush1.bf16.msra.mxu0 %v646
  %835 = vmatprep.subr.bf16.mxu0 %v649
  %836 = vmatpush1.bf16.msra.mxu0 %v648
  %837 = vmatprep.subr.bf16.mxu0 %v651
  %838 = vmatpush1.bf16.msra.mxu0 %v650
  %839 = vmatprep.subr.bf16.mxu0 %v653
  %840 = vmatpush1.bf16.msra.mxu0 %v652
  %841 = vmatprep.subr.bf16.mxu0 %v655
  %842 = vmatpush1.bf16.msra.mxu0 %v654
  %843 = vmatprep.subr.bf16.mxu0 %v657
  %844 = vmatpush1.bf16.msra.mxu0 %v656
  %845 = vmatprep.subr.bf16.mxu0 %v659
  %846 = vmatpush1.bf16.msra.mxu0 %v658
  %847 = vmatprep.subr.bf16.mxu0 %v661
  %848 = vmatpush1.bf16.msra.mxu0 %v660
  %849 = vmatprep.subr.bf16.mxu0 0
  %850 = vmatpush1.bf16.msra.mxu0 0
  %851 = vmatprep.subr.bf16.mxu0 0
  %852 = vmatpush1.bf16.msra.mxu0 0
  %853 = vmatprep.subr.bf16.mxu0 0
  %854 = vmatpush1.bf16.msra.mxu0 0
  %855 = vmatprep.subr.bf16.mxu0 0
  %856 = vmatpush1.bf16.msra.mxu0 0
  %857 = vmatprep.subr.bf16.mxu0 0
  %858 = vmatpush1.bf16.msra.mxu0 0
  %859 = vmatprep.subr.bf16.mxu0 0
  %860 = vmatpush1.bf16.msra.mxu0 0
  %861 = vmatprep.subr.bf16.mxu0 0
  %862 = vmatpush1.bf16.msra.mxu0 0
  %863 = vmatprep.subr.bf16.mxu0 0
  %864 = vmatpush1.bf16.msra.mxu0 0
  %865 = vmatprep.mubr.bf16.mxu0 0
  %866 = vmatmul.mubr.bf16.gmra.mrb[0].mxu0 %v421
  %v867 = vpop.f32.mrb[0].mxu0
  %v868 = vadd.f32 %v827, %v867
  %v869 = vpop.f32.mrb[0].mxu0
  %v870 = vadd.f32 %v829, %v869
  %v871 = vpop.f32.mrb[0].mxu0
  %v872 = vpop.f32.mrb[0].mxu0
  %873 = vdwg.mxu0
  %v874 = vmax.f32 %v786, %v868
  %v875 = vmax.f32 %v788, %v870
  %v876 = vmax.f32 %v874, %v875
  %v877 = vld [vmem:[%s4] sm:$0x1]
  %v879 = vlaneseq
  %v880 = vshrl.u32 %v879, 7
  %v881 = vsub.s32 0, %v880
  %v882 = vrot.slane %v877, %v881
  %v884 = vadd.f32 %v876, %v882
  %v885 = vmax.f32 %v884, 0.0
  %v886 = vpack.c.bf16 %v885, %v885
  %887 = vst [vmem:[%s5] sm:$0xf] %v886
  // Predicated region
  $region22: #{multimodal_cnn.2} parent=0 // pred_check
    _
  $region23: #{multimodal_cnn.2} parent=0 // pred_check_branch
    %889 = sbr.rel (0) target = $region25
  $region24: #{multimodal_cnn.2} parent=0 // pred_region
    _
  $region25: #{multimodal_cnn.2} parent=0 // pred_fallthru
    _
  // Predicated region
  $region26: #{multimodal_cnn.2} parent=0 // pred_check
    _
  $region27: #{multimodal_cnn.2} parent=0 // pred_check_branch
    %891 = sbr.rel (0) target = $region29
  $region28: #{multimodal_cnn.2} parent=0 // pred_region
    _
  $region29: #{multimodal_cnn.2} parent=0 // pred_fallthru
    _

// kernel: multimodal_cnn.3
$region0: #{multimodal_cnn.3}
  #allocation0 [shape = 'u32[]', space=smem, size = 0x4, offset = 0x4, fixed_abs, tag = 'smem constant byte address 0x4 - core index']
  #allocation1 [shape = 'u32[144,128]{1,0:T(1,128)}', space=vmem, size = 0x12000, scoped, tag = 'internal scratch']
  %s0 = inlined_call_operand.vmem [shape: bf16[2,8], index: 0, kind: input, shape index: {}]
  %s1 = inlined_call_operand.vmem [shape: bf16[2,512], index: 1, kind: input, shape index: {}]
  %s2 = inlined_call_operand.vmem [shape: bf16[8,64], index: 2, kind: input, shape index: {}]
  %s3 = inlined_call_operand.vmem [shape: f32[1,64], index: 3, kind: input, shape index: {}]
  %s4 = inlined_call_operand.vmem [shape: bf16[64,32], index: 4, kind: input, shape index: {}]
  %s5 = inlined_call_operand.vmem [shape: f32[1,32], index: 5, kind: input, shape index: {}]
  %s6 = inlined_call_operand.vmem [shape: bf16[512,64], index: 6, kind: input, shape index: {}]
  %s7 = inlined_call_operand.vmem [shape: f32[1,64], index: 7, kind: input, shape index: {}]
  %s8 = inlined_call_operand.vmem [shape: bf16[32,64], index: 8, kind: input, shape index: {}]
  %s9 = inlined_call_operand.vmem [shape: bf16[64,64], index: 9, kind: input, shape index: {}]
  %s10 = inlined_call_operand.vmem [shape: f32[1,64], index: 10, kind: input, shape index: {}]
  %s11 = inlined_call_operand.vmem [shape: bf16[64,128], index: 11, kind: input, shape index: {}]
  %s12 = inlined_call_operand.vmem [shape: f32[1,128], index: 12, kind: input, shape index: {}]
  %s13 = inlined_call_operand.hbm [shape: f32[2,128], index: 13, kind: output, shape index: {}]
  %s14 = sld [smem:[#allocation0]]
  $region62: #{multimodal_cnn.3} parent=0
    _
  %s16 = ssub.s32 1, %s14
  %s17 = scalar_select 0, %s16, %s14
  $region1: #{multimodal_cnn.3} parent=0
    #allocation2 [shape = 'u8[1024]{0}', space=vmem, size = 0x400, scoped, tag = 'output window, operand 0, single buffered']
    #allocation3 [shape = 's32[1]{0}', space=sflag, size = 0x4, scoped, tag = 'scoped memory for multimodal_cnn.3']
    %18 = vsyncpa [#allocation3], 0
    // Predicated region
    $region2: #{multimodal_cnn.3} parent=1 // pred_check
      _
    $region3: #{multimodal_cnn.3} parent=1 // pred_check_branch
      %20 = sbr.rel (0) target = $region5
    $region4: #{multimodal_cnn.3} parent=1 // pred_region
      _
    $region5: #{multimodal_cnn.3} parent=1 // pred_fallthru
      _
    // Predicated region
    $region6: #{multimodal_cnn.3} parent=1 // pred_check
      _
    $region7: #{multimodal_cnn.3} parent=1 // pred_check_branch
      %22 = sbr.rel (0) target = $region9
    $region8: #{multimodal_cnn.3} parent=1 // pred_region
      _
    $region9: #{multimodal_cnn.3} parent=1 // pred_fallthru
      _
    // Predicated region
    $region10: #{multimodal_cnn.3} parent=1 // pred_check
      _
    $region11: #{multimodal_cnn.3} parent=1 // pred_check_branch
      %24 = sbr.rel (0) target = $region13
    $region12: #{multimodal_cnn.3} parent=1 // pred_region
      _
    $region13: #{multimodal_cnn.3} parent=1 // pred_fallthru
      _
    // Predicated region
    $region14: #{multimodal_cnn.3} parent=1 // pred_check
      _
    $region15: #{multimodal_cnn.3} parent=1 // pred_check_branch
      %26 = sbr.rel (0) target = $region17
    $region16: #{multimodal_cnn.3} parent=1 // pred_region
      _
    $region17: #{multimodal_cnn.3} parent=1 // pred_fallthru
      _
    // Predicated region
    $region18: #{multimodal_cnn.3} parent=1 // pred_check
      _
    $region19: #{multimodal_cnn.3} parent=1 // pred_check_branch
      %28 = sbr.rel (0) target = $region21
    $region20: #{multimodal_cnn.3} parent=1 // pred_region
      _
    $region21: #{multimodal_cnn.3} parent=1 // pred_fallthru
      _
    // Predicated region
    $region22: #{multimodal_cnn.3} parent=1 // pred_check
      _
    $region23: #{multimodal_cnn.3} parent=1 // pred_check_branch
      %30 = sbr.rel (0) target = $region25
    $region24: #{multimodal_cnn.3} parent=1 // pred_region
      _
    $region25: #{multimodal_cnn.3} parent=1 // pred_fallthru
      _
    // Predicated region
    $region26: #{multimodal_cnn.3} parent=1 // pred_check
      _
    $region27: #{multimodal_cnn.3} parent=1 // pred_check_branch
      %32 = sbr.rel (0) target = $region29
    $region28: #{multimodal_cnn.3} parent=1 // pred_region
      _
    $region29: #{multimodal_cnn.3} parent=1 // pred_fallthru
      _
    // Predicated region
    $region30: #{multimodal_cnn.3} parent=1 // pred_check
      _
    $region31: #{multimodal_cnn.3} parent=1 // pred_check_branch
      %34 = sbr.rel (0) target = $region33
    $region32: #{multimodal_cnn.3} parent=1 // pred_region
      _
    $region33: #{multimodal_cnn.3} parent=1 // pred_fallthru
      _
    // Predicated region
    $region34: #{multimodal_cnn.3} parent=1 // pred_check
      _
    $region35: #{multimodal_cnn.3} parent=1 // pred_check_branch
      %36 = sbr.rel (0) target = $region37
    $region36: #{multimodal_cnn.3} parent=1 // pred_region
      _
    $region37: #{multimodal_cnn.3} parent=1 // pred_fallthru
      _
    // Predicated region
    $region38: #{multimodal_cnn.3} parent=1 // pred_check
      _
    $region39: #{multimodal_cnn.3} parent=1 // pred_check_branch
      %38 = sbr.rel (0) target = $region41
    $region40: #{multimodal_cnn.3} parent=1 // pred_region
      _
    $region41: #{multimodal_cnn.3} parent=1 // pred_fallthru
      _
    // Predicated region
    $region42: #{multimodal_cnn.3} parent=1 // pred_check
      _
    $region43: #{multimodal_cnn.3} parent=1 // pred_check_branch
      %40 = sbr.rel (0) target = $region45
    $region44: #{multimodal_cnn.3} parent=1 // pred_region
      _
    $region45: #{multimodal_cnn.3} parent=1 // pred_fallthru
      _
    // Predicated region
    $region46: #{multimodal_cnn.3} parent=1 // pred_check
      _
    $region47: #{multimodal_cnn.3} parent=1 // pred_check_branch
      %42 = sbr.rel (0) target = $region49
    $region48: #{multimodal_cnn.3} parent=1 // pred_region
      _
    $region49: #{multimodal_cnn.3} parent=1 // pred_fallthru
      _
    // Predicated region
    $region50: #{multimodal_cnn.3} parent=1 // pred_check
      _
    $region51: #{multimodal_cnn.3} parent=1 // pred_check_branch
      %44 = sbr.rel (0) target = $region53
    $region52: #{multimodal_cnn.3} parent=1 // pred_region
      _
    $region53: #{multimodal_cnn.3} parent=1 // pred_fallthru
      _
    %v46 = vld [vmem:[%s0] sm:$0x1]
    %v47 = vld [vmem:[%s2] sm:$0xf]
    %v48 = vld [vmem:[%s3] sm:$0x1]
    %v50 = vlaneseq
    %v51 = vshrl.u32 %v50, 7
    %v52 = vsub.s32 0, %v51
    %v53 = vrot.slane %v48, %v52
    %vm55 = vcmask 64512
    %v57 = vsel %vm55, %v46, 0
    %vm59 = vcmask 1043456
    %v61 = vsel %vm59, %v47, 0
    %63 = vmatprep.subr.bf16.mxu0 0
    %64 = vmatpush1.bf16.msra.mxu0 %v61
    %65 = vmatprep.subr.bf16.mxu0 0
    %66 = vmatpush1.bf16.msra.mxu0 0
    %67 = vmatprep.subr.bf16.mxu0 0
    %68 = vmatpush1.bf16.msra.mxu0 0
    %69 = vmatprep.subr.bf16.mxu0 0
    %70 = vmatpush1.bf16.msra.mxu0 0
    %71 = vmatprep.subr.bf16.mxu0 0
    %72 = vmatpush1.bf16.msra.mxu0 0
    %73 = vmatprep.subr.bf16.mxu0 0
    %74 = vmatpush1.bf16.msra.mxu0 0
    %75 = vmatprep.subr.bf16.mxu0 0
    %76 = vmatpush1.bf16.msra.mxu0 0
    %77 = vmatprep.subr.bf16.mxu0 0
    %78 = vmatpush1.bf16.msra.mxu0 0
    %79 = vmatprep.subr.bf16.mxu0 0
    %80 = vmatpush1.bf16.msra.mxu0 0
    %81 = vmatprep.subr.bf16.mxu0 0
    %82 = vmatpush1.bf16.msra.mxu0 0
    %83 = vmatprep.subr.bf16.mxu0 0
    %84 = vmatpush1.bf16.msra.mxu0 0
    %85 = vmatprep.subr.bf16.mxu0 0
    %86 = vmatpush1.bf16.msra.mxu0 0
    %87 = vmatprep.subr.bf16.mxu0 0
    %88 = vmatpush1.bf16.msra.mxu0 0
    %89 = vmatprep.subr.bf16.mxu0 0
    %90 = vmatpush1.bf16.msra.mxu0 0
    %91 = vmatprep.subr.bf16.mxu0 0
    %92 = vmatpush1.bf16.msra.mxu0 0
    %93 = vmatprep.subr.bf16.mxu0 0
    %94 = vmatpush1.bf16.msra.mxu0 0
    %95 = vmatprep.mubr.bf16.mxu0 0
    %96 = vmatmul.mubr.bf16.gmra.mrb[0].mxu0 %v57
    %v97 = vpop.f32.mrb[0].mxu0
    %v98 = vadd.f32 %v53, %v97
    %v99 = vpop.f32.mrb[0].mxu0
    %v100 = vpop.f32.mrb[0].mxu0
    %v101 = vpop.f32.mrb[0].mxu0
    %102 = vdwg.mxu0
    %v103 = vmax.f32 %v98, 0.0
    %v104 = vpack.c.bf16 %v103, %v103
    %v105 = vld [vmem:[%s4] sm:$0xf]
    %v106 = vld [vmem:[%s4 + $0x4] sm:$0xf]
    %v107 = vld [vmem:[%s4 + $0x8] sm:$0xf]
    %v108 = vld [vmem:[%s4 + $0xc] sm:$0xf]
    %v109 = vld [vmem:[%s4 + $0x10] sm:$0xf]
    %v110 = vld [vmem:[%s4 + $0x14] sm:$0xf]
    %v111 = vld [vmem:[%s4 + $0x18] sm:$0xf]
    %v112 = vld [vmem:[%s4 + $0x1c] sm:$0xf]
    %v113 = vld [vmem:[%s5] sm:$0x1]
    %v115 = vlaneseq
    %v116 = vshrl.u32 %v115, 7
    %v117 = vsub.s32 0, %v116
    %v118 = vrot.slane %v113, %v117
    %v128 = vunpack.c.l.b16 %v105
    %v129 = vunpack.c.l.b16 %v106
    %v130 = vunpack.c.l.b16 %v107
    %v131 = vunpack.c.l.b16 %v108
    %v132 = vunpack.c.l.b16 %v109
    %v133 = vunpack.c.l.b16 %v110
    %v134 = vunpack.c.l.b16 %v111
    %v135 = vunpack.c.l.b16 %v112
    %v136 = vpack.c.b16 %v129, %v128
    %v137 = vpack.c.b16 %v131, %v130
    %v138 = vpack.c.b16 %v133, %v132
    %v139 = vpack.c.b16 %v135, %v134
    %vm144 = vcmask 523264
    %v146 = vsel %vm144, %v104, 0
    %148 = vmatprep.subr.bf16.mxu0 0
    %149 = vmatpush1.bf16.msra.mxu0 %v136
    %150 = vmatprep.subr.bf16.mxu0 0
    %151 = vmatpush1.bf16.msra.mxu0 %v137
    %152 = vmatprep.subr.bf16.mxu0 0
    %153 = vmatpush1.bf16.msra.mxu0 %v138
    %154 = vmatprep.subr.bf16.mxu0 0
    %155 = vmatpush1.bf16.msra.mxu0 %v139
    %156 = vmatprep.subr.bf16.mxu0 0
    %157 = vmatpush1.bf16.msra.mxu0 0
    %158 = vmatprep.subr.bf16.mxu0 0
    %159 = vmatpush1.bf16.msra.mxu0 0
    %160 = vmatprep.subr.bf16.mxu0 0
    %161 = vmatpush1.bf16.msra.mxu0 0
    %162 = vmatprep.subr.bf16.mxu0 0
    %163 = vmatpush1.bf16.msra.mxu0 0
    %164 = vmatprep.subr.bf16.mxu0 0
    %165 = vmatpush1.bf16.msra.mxu0 0
    %166 = vmatprep.subr.bf16.mxu0 0
    %167 = vmatpush1.bf16.msra.mxu0 0
    %168 = vmatprep.subr.bf16.mxu0 0
    %169 = vmatpush1.bf16.msra.mxu0 0
    %170 = vmatprep.subr.bf16.mxu0 0
    %171 = vmatpush1.bf16.msra.mxu0 0
    %172 = vmatprep.subr.bf16.mxu0 0
    %173 = vmatpush1.bf16.msra.mxu0 0
    %174 = vmatprep.subr.bf16.mxu0 0
    %175 = vmatpush1.bf16.msra.mxu0 0
    %176 = vmatprep.subr.bf16.mxu0 0
    %177 = vmatpush1.bf16.msra.mxu0 0
    %178 = vmatprep.subr.bf16.mxu0 0
    %179 = vmatpush1.bf16.msra.mxu0 0
    %180 = vmatprep.mubr.bf16.mxu0 0
    %181 = vmatmul.mubr.bf16.gmra.mrb[0].mxu0 %v146
    %v182 = vpop.f32.mrb[0].mxu0
    %v183 = vadd.f32 %v118, %v182
    %v184 = vpop.f32.mrb[0].mxu0
    %v185 = vpop.f32.mrb[0].mxu0
    %v186 = vpop.f32.mrb[0].mxu0
    %187 = vdwg.mxu0
    %v188 = vmax.f32 %v183, 0.0
    %v189 = vld [vmem:[%s1] sm:$0xf]
    %v190 = vld [vmem:[%s6] sm:$0xf]
    %v191 = vld [vmem:[%s6 + $0x4] sm:$0xf]
    %v192 = vld [vmem:[%s6 + $0x8] sm:$0xf]
    %v193 = vld [vmem:[%s6 + $0xc] sm:$0xf]
    %v194 = vld [vmem:[%s6 + $0x10] sm:$0xf]
    %v195 = vld [vmem:[%s6 + $0x14] sm:$0xf]
    %v196 = vld [vmem:[%s6 + $0x18] sm:$0xf]
    %v197 = vld [vmem:[%s6 + $0x1c] sm:$0xf]
    %v198 = vld [vmem:[%s6 + $0x20] sm:$0xf]
    %v199 = vld [vmem:[%s6 + $0x24] sm:$0xf]
    %v200 = vld [vmem:[%s6 + $0x28] sm:$0xf]
    %v201 = vld [vmem:[%s6 + $0x2c] sm:$0xf]
    %v202 = vld [vmem:[%s6 + $0x30] sm:$0xf]
    %v203 = vld [vmem:[%s6 + $0x34] sm:$0xf]
    %v204 = vld [vmem:[%s6 + $0x38] sm:$0xf]
    %v205 = vld [vmem:[%s6 + $0x3c] sm:$0xf]
    %v206 = vld [vmem:[%s6 + $0x40] sm:$0xf]
    %v207 = vld [vmem:[%s6 + $0x44] sm:$0xf]
    %v208 = vld [vmem:[%s6 + $0x48] sm:$0xf]
    %v209 = vld [vmem:[%s6 + $0x4c] sm:$0xf]
    %v210 = vld [vmem:[%s6 + $0x50] sm:$0xf]
    %v211 = vld [vmem:[%s6 + $0x54] sm:$0xf]
    %v212 = vld [vmem:[%s6 + $0x58] sm:$0xf]
    %v213 = vld [vmem:[%s6 + $0x5c] sm:$0xf]
    %v214 = vld [vmem:[%s6 + $0x60] sm:$0xf]
    %v215 = vld [vmem:[%s6 + $0x64] sm:$0xf]
    %v216 = vld [vmem:[%s6 + $0x68] sm:$0xf]
    %v217 = vld [vmem:[%s6 + $0x6c] sm:$0xf]
    %v218 = vld [vmem:[%s6 + $0x70] sm:$0xf]
    %v219 = vld [vmem:[%s6 + $0x74] sm:$0xf]
    %v220 = vld [vmem:[%s6 + $0x78] sm:$0xf]
    %v221 = vld [vmem:[%s6 + $0x7c] sm:$0xf]
    %v222 = vld [vmem:[%s6 + $0x80] sm:$0xf]
    %v223 = vld [vmem:[%s6 + $0x84] sm:$0xf]
    %v224 = vld [vmem:[%s6 + $0x88] sm:$0xf]
    %v225 = vld [vmem:[%s6 + $0x8c] sm:$0xf]
    %v226 = vld [vmem:[%s6 + $0x90] sm:$0xf]
    %v227 = vld [vmem:[%s6 + $0x94] sm:$0xf]
    %v228 = vld [vmem:[%s6 + $0x98] sm:$0xf]
    %v229 = vld [vmem:[%s6 + $0x9c] sm:$0xf]
    %v230 = vld [vmem:[%s6 + $0xa0] sm:$0xf]
    %v231 = vld [vmem:[%s6 + $0xa4] sm:$0xf]
    %v232 = vld [vmem:[%s6 + $0xa8] sm:$0xf]
    %v233 = vld [vmem:[%s6 + $0xac] sm:$0xf]
    %v234 = vld [vmem:[%s6 + $0xb0] sm:$0xf]
    %v235 = vld [vmem:[%s6 + $0xb4] sm:$0xf]
    %v236 = vld [vmem:[%s6 + $0xb8] sm:$0xf]
    %v237 = vld [vmem:[%s6 + $0xbc] sm:$0xf]
    %v238 = vld [vmem:[%s6 + $0xc0] sm:$0xf]
    %v239 = vld [vmem:[%s6 + $0xc4] sm:$0xf]
    %v240 = vld [vmem:[%s6 + $0xc8] sm:$0xf]
    %v241 = vld [vmem:[%s6 + $0xcc] sm:$0xf]
    %v242 = vld [vmem:[%s6 + $0xd0] sm:$0xf]
    %v243 = vld [vmem:[%s6 + $0xd4] sm:$0xf]
    %v244 = vld [vmem:[%s6 + $0xd8] sm:$0xf]
    %v245 = vld [vmem:[%s6 + $0xdc] sm:$0xf]
    %v246 = vld [vmem:[%s6 + $0xe0] sm:$0xf]
    %v247 = vld [vmem:[%s6 + $0xe4] sm:$0xf]
    %v248 = vld [vmem:[%s6 + $0xe8] sm:$0xf]
    %v249 = vld [vmem:[%s6 + $0xec] sm:$0xf]
    %v250 = vld [vmem:[%s6 + $0xf0] sm:$0xf]
    %v251 = vld [vmem:[%s6 + $0xf4] sm:$0xf]
    %v252 = vld [vmem:[%s6 + $0xf8] sm:$0xf]
    %v253 = vld [vmem:[%s6 + $0xfc] sm:$0xf]
    %v254 = vld [vmem:[%s7] sm:$0x1]
    %v256 = vlaneseq
    %v257 = vshrl.u32 %v256, 7
    %v258 = vsub.s32 0, %v257
    %v259 = vrot.slane %v254, %v258
    %v263 = vunpack.c.l.s4 1966171168
    %v264 = vunpack.c.0.s8 %v263
    %v265 = vlaneseq
    %v266 = vshrl.u32 %v265, 7
    %v267 = vsub.s32 %v264, %v266
    %v268 = vrot.slane %v189, %v267
    %v269 = vcombine.high %v268, %v268
    %v271 = vunpack.c.l.s4 1966171168
    %v272 = vunpack.c.0.s8 %v271
    %v273 = vlaneseq
    %v274 = vshrl.u32 %v273, 7
    %v275 = vsub.s32 %v272, %v274
    %v276 = vrot.slane %v268, %v275
    %v278 = vunpack.c.l.s4 1966171168
    %v279 = vunpack.c.0.s8 %v278
    %v280 = vlaneseq
    %v281 = vshrl.u32 %v280, 7
    %v282 = vsub.s32 %v279, %v281
    %v283 = vrot.slane %v269, %v282
    %v284 = vcombine.high %v276, %v276
    %v285 = vcombine.high %v283, %v283
    %v354 = vunpack.c.l.b16 %v190
    %v355 = vunpack.c.l.b16 %v191
    %v356 = vunpack.c.l.b16 %v192
    %v357 = vunpack.c.l.b16 %v193
    %v358 = vunpack.c.l.b16 %v194
    %v359 = vunpack.c.l.b16 %v195
    %v360 = vunpack.c.l.b16 %v196
    %v361 = vunpack.c.l.b16 %v197
    %v362 = vunpack.c.l.b16 %v198
    %v363 = vunpack.c.l.b16 %v199
    %v364 = vunpack.c.l.b16 %v200
    %v365 = vunpack.c.l.b16 %v201
    %v366 = vunpack.c.l.b16 %v202
    %v367 = vunpack.c.l.b16 %v203
    %v368 = vunpack.c.l.b16 %v204
    %v369 = vunpack.c.l.b16 %v205
    %v370 = vunpack.c.l.b16 %v206
    %v371 = vunpack.c.l.b16 %v207
    %v372 = vunpack.c.l.b16 %v208
    %v373 = vunpack.c.l.b16 %v209
    %v374 = vunpack.c.l.b16 %v210
    %v375 = vunpack.c.l.b16 %v211
    %v376 = vunpack.c.l.b16 %v212
    %v377 = vunpack.c.l.b16 %v213
    %v378 = vunpack.c.l.b16 %v214
    %v379 = vunpack.c.l.b16 %v215
    %v380 = vunpack.c.l.b16 %v216
    %v381 = vunpack.c.l.b16 %v217
    %v382 = vunpack.c.l.b16 %v218
    %v383 = vunpack.c.l.b16 %v219
    %v384 = vunpack.c.l.b16 %v220
    %v385 = vunpack.c.l.b16 %v221
    %v386 = vunpack.c.l.b16 %v222
    %v387 = vunpack.c.l.b16 %v223
    %v388 = vunpack.c.l.b16 %v224
    %v389 = vunpack.c.l.b16 %v225
    %v390 = vunpack.c.l.b16 %v226
    %v391 = vunpack.c.l.b16 %v227
    %v392 = vunpack.c.l.b16 %v228
    %v393 = vunpack.c.l.b16 %v229
    %v394 = vunpack.c.l.b16 %v230
    %v395 = vunpack.c.l.b16 %v231
    %v396 = vunpack.c.l.b16 %v232
    %v397 = vunpack.c.l.b16 %v233
    %v398 = vunpack.c.l.b16 %v234
    %v399 = vunpack.c.l.b16 %v235
    %v400 = vunpack.c.l.b16 %v236
    %v401 = vunpack.c.l.b16 %v237
    %v402 = vunpack.c.l.b16 %v238
    %v403 = vunpack.c.l.b16 %v239
    %v404 = vunpack.c.l.b16 %v240
    %v405 = vunpack.c.l.b16 %v241
    %v406 = vunpack.c.l.b16 %v242
    %v407 = vunpack.c.l.b16 %v243
    %v408 = vunpack.c.l.b16 %v244
    %v409 = vunpack.c.l.b16 %v245
    %v410 = vunpack.c.l.b16 %v246
    %v411 = vunpack.c.l.b16 %v247
    %v412 = vunpack.c.l.b16 %v248
    %v413 = vunpack.c.l.b16 %v249
    %v414 = vunpack.c.l.b16 %v250
    %v415 = vunpack.c.l.b16 %v251
    %v416 = vunpack.c.l.b16 %v252
    %v417 = vunpack.c.l.b16 %v253
    %v418 = vpack.c.b16 %v355, %v354
    %v419 = vpack.c.b16 %v357, %v356
    %v420 = vpack.c.b16 %v359, %v358
    %v421 = vpack.c.b16 %v361, %v360
    %v422 = vpack.c.b16 %v363, %v362
    %v423 = vpack.c.b16 %v365, %v364
    %v424 = vpack.c.b16 %v367, %v366
    %v425 = vpack.c.b16 %v369, %v368
    %v426 = vpack.c.b16 %v371, %v370
    %v427 = vpack.c.b16 %v373, %v372
    %v428 = vpack.c.b16 %v375, %v374
    %v429 = vpack.c.b16 %v377, %v376
    %v430 = vpack.c.b16 %v379, %v378
    %v431 = vpack.c.b16 %v381, %v380
    %v432 = vpack.c.b16 %v383, %v382
    %v433 = vpack.c.b16 %v385, %v384
    %v434 = vpack.c.b16 %v387, %v386
    %v435 = vpack.c.b16 %v389, %v388
    %v436 = vpack.c.b16 %v391, %v390
    %v437 = vpack.c.b16 %v393, %v392
    %v438 = vpack.c.b16 %v395, %v394
    %v439 = vpack.c.b16 %v397, %v396
    %v440 = vpack.c.b16 %v399, %v398
    %v441 = vpack.c.b16 %v401, %v400
    %v442 = vpack.c.b16 %v403, %v402
    %v443 = vpack.c.b16 %v405, %v404
    %v444 = vpack.c.b16 %v407, %v406
    %v445 = vpack.c.b16 %v409, %v408
    %v446 = vpack.c.b16 %v411, %v410
    %v447 = vpack.c.b16 %v413, %v412
    %v448 = vpack.c.b16 %v415, %v414
    %v449 = vpack.c.b16 %v417, %v416
    %482 = vmatprep.subr.bf16.mxu0 0
    %483 = vmatpush1.bf16.msra.mxu0 %v418
    %484 = vmatprep.subr.bf16.mxu0 0
    %485 = vmatpush1.bf16.msra.mxu0 %v419
    %486 = vmatprep.subr.bf16.mxu0 0
    %487 = vmatpush1.bf16.msra.mxu0 %v420
    %488 = vmatprep.subr.bf16.mxu0 0
    %489 = vmatpush1.bf16.msra.mxu0 %v421
    %490 = vmatprep.subr.bf16.mxu0 0
    %491 = vmatpush1.bf16.msra.mxu0 %v422
    %492 = vmatprep.subr.bf16.mxu0 0
    %493 = vmatpush1.bf16.msra.mxu0 %v423
    %494 = vmatprep.subr.bf16.mxu0 0
    %495 = vmatpush1.bf16.msra.mxu0 %v424
    %496 = vmatprep.subr.bf16.mxu0 0
    %497 = vmatpush1.bf16.msra.mxu0 %v425
    %498 = vmatprep.subr.bf16.mxu0 0
    %499 = vmatpush1.bf16.msra.mxu0 %v426
    %500 = vmatprep.subr.bf16.mxu0 0
    %501 = vmatpush1.bf16.msra.mxu0 %v427
    %502 = vmatprep.subr.bf16.mxu0 0
    %503 = vmatpush1.bf16.msra.mxu0 %v428
    %504 = vmatprep.subr.bf16.mxu0 0
    %505 = vmatpush1.bf16.msra.mxu0 %v429
    %506 = vmatprep.subr.bf16.mxu0 0
    %507 = vmatpush1.bf16.msra.mxu0 %v430
    %508 = vmatprep.subr.bf16.mxu0 0
    %509 = vmatpush1.bf16.msra.mxu0 %v431
    %510 = vmatprep.subr.bf16.mxu0 0
    %511 = vmatpush1.bf16.msra.mxu0 %v432
    %512 = vmatprep.subr.bf16.mxu0 0
    %513 = vmatpush1.bf16.msra.mxu0 %v433
    %514 = vmatprep.mubr.bf16.mxu0 %v283
    %515 = vmatmul.mubr.bf16.gmra.mrb[0].mxu0 %v276
    %v516 = vpop.f32.mrb[0].mxu0
    %v517 = vadd.f32 %v259, %v516
    %v518 = vpop.f32.mrb[0].mxu0
    %v519 = vpop.f32.mrb[0].mxu0
    %v520 = vpop.f32.mrb[0].mxu0
    %521 = vdwg.mxu0
    %522 = vmatprep.subr.bf16.mxu0 0
    %523 = vmatpush1.bf16.msra.mxu0 %v434
    %524 = vmatprep.subr.bf16.mxu0 0
    %525 = vmatpush1.bf16.msra.mxu0 %v435
    %526 = vmatprep.subr.bf16.mxu0 0
    %527 = vmatpush1.bf16.msra.mxu0 %v436
    %528 = vmatprep.subr.bf16.mxu0 0
    %529 = vmatpush1.bf16.msra.mxu0 %v437
    %530 = vmatprep.subr.bf16.mxu0 0
    %531 = vmatpush1.bf16.msra.mxu0 %v438
    %532 = vmatprep.subr.bf16.mxu0 0
    %533 = vmatpush1.bf16.msra.mxu0 %v439
    %534 = vmatprep.subr.bf16.mxu0 0
    %535 = vmatpush1.bf16.msra.mxu0 %v440
    %536 = vmatprep.subr.bf16.mxu0 0
    %537 = vmatpush1.bf16.msra.mxu0 %v441
    %538 = vmatprep.subr.bf16.mxu0 0
    %539 = vmatpush1.bf16.msra.mxu0 %v442
    %540 = vmatprep.subr.bf16.mxu0 0
    %541 = vmatpush1.bf16.msra.mxu0 %v443
    %542 = vmatprep.subr.bf16.mxu0 0
    %543 = vmatpush1.bf16.msra.mxu0 %v444
    %544 = vmatprep.subr.bf16.mxu0 0
    %545 = vmatpush1.bf16.msra.mxu0 %v445
    %546 = vmatprep.subr.bf16.mxu0 0
    %547 = vmatpush1.bf16.msra.mxu0 %v446
    %548 = vmatprep.subr.bf16.mxu0 0
    %549 = vmatpush1.bf16.msra.mxu0 %v447
    %550 = vmatprep.subr.bf16.mxu0 0
    %551 = vmatpush1.bf16.msra.mxu0 %v448
    %552 = vmatprep.subr.bf16.mxu0 0
    %553 = vmatpush1.bf16.msra.mxu0 %v449
    %554 = vmatprep.mubr.bf16.mxu0 %v285
    %555 = vmatmul.mubr.bf16.gmra.mrb[0].mxu0 %v284
    %v556 = vpop.f32.mrb[0].mxu0
    %v557 = vadd.f32 %v517, %v556
    %v558 = vpop.f32.mrb[0].mxu0
    %v559 = vpop.f32.mrb[0].mxu0
    %v560 = vpop.f32.mrb[0].mxu0
    %561 = vdwg.mxu0
    %v562 = vmax.f32 %v557, 0.0
    %v563 = vpack.c.bf16 %v188, %v188
    %v564 = vld [vmem:[%s8] sm:$0xf]
    %v565 = vld [vmem:[%s8 + $0x4] sm:$0xf]
    %v566 = vld [vmem:[%s8 + $0x8] sm:$0xf]
    %v567 = vld [vmem:[%s8 + $0xc] sm:$0xf]
    %v568 = vpack.c.bf16 %v562, %v562
    %v569 = vld [vmem:[%s9] sm:$0xf]
    %v570 = vld [vmem:[%s9 + $0x4] sm:$0xf]
    %v571 = vld [vmem:[%s9 + $0x8] sm:$0xf]
    %v572 = vld [vmem:[%s9 + $0xc] sm:$0xf]
    %v573 = vld [vmem:[%s9 + $0x10] sm:$0xf]
    %v574 = vld [vmem:[%s9 + $0x14] sm:$0xf]
    %v575 = vld [vmem:[%s9 + $0x18] sm:$0xf]
    %v576 = vld [vmem:[%s9 + $0x1c] sm:$0xf]
    %v585 = vunpack.c.l.b16 %v569
    %v586 = vunpack.c.l.b16 %v570
    %v587 = vunpack.c.l.b16 %v571
    %v588 = vunpack.c.l.b16 %v572
    %v589 = vunpack.c.l.b16 %v573
    %v590 = vunpack.c.l.b16 %v574
    %v591 = vunpack.c.l.b16 %v575
    %v592 = vunpack.c.l.b16 %v576
    %v593 = vpack.c.b16 %v586, %v585
    %v594 = vpack.c.b16 %v588, %v587
    %v595 = vpack.c.b16 %v590, %v589
    %v596 = vpack.c.b16 %v592, %v591
    %v602 = vsel %vm144, %v568, 0
    %604 = vmatprep.subr.bf16.mxu0 0
    %605 = vmatpush1.bf16.msra.mxu0 %v593
    %606 = vmatprep.subr.bf16.mxu0 0
    %607 = vmatpush1.bf16.msra.mxu0 %v594
    %608 = vmatprep.subr.bf16.mxu0 0
    %609 = vmatpush1.bf16.msra.mxu0 %v595
    %610 = vmatprep.subr.bf16.mxu0 0
    %611 = vmatpush1.bf16.msra.mxu0 %v596
    %612 = vmatprep.subr.bf16.mxu0 0
    %613 = vmatpush1.bf16.msra.mxu0 0
    %614 = vmatprep.subr.bf16.mxu0 0
    %615 = vmatpush1.bf16.msra.mxu0 0
    %616 = vmatprep.subr.bf16.mxu0 0
    %617 = vmatpush1.bf16.msra.mxu0 0
    %618 = vmatprep.subr.bf16.mxu0 0
    %619 = vmatpush1.bf16.msra.mxu0 0
    %620 = vmatprep.subr.bf16.mxu0 0
    %621 = vmatpush1.bf16.msra.mxu0 0
    %622 = vmatprep.subr.bf16.mxu0 0
    %623 = vmatpush1.bf16.msra.mxu0 0
    %624 = vmatprep.subr.bf16.mxu0 0
    %625 = vmatpush1.bf16.msra.mxu0 0
    %626 = vmatprep.subr.bf16.mxu0 0
    %627 = vmatpush1.bf16.msra.mxu0 0
    %628 = vmatprep.subr.bf16.mxu0 0
    %629 = vmatpush1.bf16.msra.mxu0 0
    %630 = vmatprep.subr.bf16.mxu0 0
    %631 = vmatpush1.bf16.msra.mxu0 0
    %632 = vmatprep.subr.bf16.mxu0 0
    %633 = vmatpush1.bf16.msra.mxu0 0
    %634 = vmatprep.subr.bf16.mxu0 0
    %635 = vmatpush1.bf16.msra.mxu0 0
    %636 = vmatprep.mubr.bf16.mxu0 0
    %637 = vmatmul.mubr.bf16.gmra.mrb[0].mxu0 %v602
    %v638 = vpop.f32.mrb[0].mxu0
    %v639 = vadd.f32 0.0, %v638
    %v640 = vpop.f32.mrb[0].mxu0
    %v641 = vpop.f32.mrb[0].mxu0
    %v642 = vpop.f32.mrb[0].mxu0
    %643 = vdwg.mxu0
    %v648 = vunpack.c.l.b16 %v564
    %v649 = vunpack.c.l.b16 %v565
    %v650 = vunpack.c.l.b16 %v566
    %v651 = vunpack.c.l.b16 %v567
    %v652 = vpack.c.b16 %v649, %v648
    %v653 = vpack.c.b16 %v651, %v650
    %vm656 = vcmask 261120
    %v658 = vsel %vm656, %v563, 0
    %660 = vmatprep.subr.bf16.mxu0 0
    %661 = vmatpush1.bf16.msra.mxu0 %v652
    %662 = vmatprep.subr.bf16.mxu0 0
    %663 = vmatpush1.bf16.msra.mxu0 %v653
    %664 = vmatprep.subr.bf16.mxu0 0
    %665 = vmatpush1.bf16.msra.mxu0 0
    %666 = vmatprep.subr.bf16.mxu0 0
    %667 = vmatpush1.bf16.msra.mxu0 0
    %668 = vmatprep.subr.bf16.mxu0 0
    %669 = vmatpush1.bf16.msra.mxu0 0
    %670 = vmatprep.subr.bf16.mxu0 0
    %671 = vmatpush1.bf16.msra.mxu0 0
    %672 = vmatprep.subr.bf16.mxu0 0
    %673 = vmatpush1.bf16.msra.mxu0 0
    %674 = vmatprep.subr.bf16.mxu0 0
    %675 = vmatpush1.bf16.msra.mxu0 0
    %676 = vmatprep.subr.bf16.mxu0 0
    %677 = vmatpush1.bf16.msra.mxu0 0
    %678 = vmatprep.subr.bf16.mxu0 0
    %679 = vmatpush1.bf16.msra.mxu0 0
    %680 = vmatprep.subr.bf16.mxu0 0
    %681 = vmatpush1.bf16.msra.mxu0 0
    %682 = vmatprep.subr.bf16.mxu0 0
    %683 = vmatpush1.bf16.msra.mxu0 0
    %684 = vmatprep.subr.bf16.mxu0 0
    %685 = vmatpush1.bf16.msra.mxu0 0
    %686 = vmatprep.subr.bf16.mxu0 0
    %687 = vmatpush1.bf16.msra.mxu0 0
    %688 = vmatprep.subr.bf16.mxu0 0
    %689 = vmatpush1.bf16.msra.mxu0 0
    %690 = vmatprep.subr.bf16.mxu0 0
    %691 = vmatpush1.bf16.msra.mxu0 0
    %692 = vmatprep.mubr.bf16.mxu0 0
    %693 = vmatmul.mubr.bf16.gmra.mrb[0].mxu0 %v658
    %v694 = vpop.f32.mrb[0].mxu0
    %v695 = vadd.f32 %v639, %v694
    %v696 = vpop.f32.mrb[0].mxu0
    %v697 = vpop.f32.mrb[0].mxu0
    %v698 = vpop.f32.mrb[0].mxu0
    %699 = vdwg.mxu0
    %v700 = vld [vmem:[%s10] sm:$0x1]
    %v702 = vlaneseq
    %v703 = vshrl.u32 %v702, 7
    %v704 = vsub.s32 0, %v703
    %v705 = vrot.slane %v700, %v704
    %v707 = vadd.f32 %v695, %v705
    %v708 = vmax.f32 %v707, 0.0
    %v709 = vpack.c.bf16 %v708, %v708
    %v710 = vld [vmem:[%s11] sm:$0xf]
    %v711 = vld [vmem:[%s11 + $0x4] sm:$0xf]
    %v712 = vld [vmem:[%s11 + $0x8] sm:$0xf]
    %v713 = vld [vmem:[%s11 + $0xc] sm:$0xf]
    %v714 = vld [vmem:[%s11 + $0x10] sm:$0xf]
    %v715 = vld [vmem:[%s11 + $0x14] sm:$0xf]
    %v716 = vld [vmem:[%s11 + $0x18] sm:$0xf]
    %v717 = vld [vmem:[%s11 + $0x1c] sm:$0xf]
    %v718 = vld [vmem:[%s12] sm:$0x1]
    %v720 = vlaneseq
    %v721 = vshrl.u32 %v720, 7
    %v722 = vsub.s32 0, %v721
    %v723 = vrot.slane %v718, %v722
    %v733 = vunpack.c.l.b16 %v710
    %v734 = vunpack.c.l.b16 %v711
    %v735 = vunpack.c.l.b16 %v712
    %v736 = vunpack.c.l.b16 %v713
    %v737 = vunpack.c.l.b16 %v714
    %v738 = vunpack.c.l.b16 %v715
    %v739 = vunpack.c.l.b16 %v716
    %v740 = vunpack.c.l.b16 %v717
    %v741 = vpack.c.b16 %v734, %v733
    %v742 = vpack.c.b16 %v736, %v735
    %v743 = vpack.c.b16 %v738, %v737
    %v744 = vpack.c.b16 %v740, %v739
    %v750 = vsel %vm144, %v709, 0
    %752 = vmatprep.subr.bf16.mxu0 0
    %753 = vmatpush1.bf16.msra.mxu0 %v741
    %754 = vmatprep.subr.bf16.mxu0 0
    %755 = vmatpush1.bf16.msra.mxu0 %v742
    %756 = vmatprep.subr.bf16.mxu0 0
    %757 = vmatpush1.bf16.msra.mxu0 %v743
    %758 = vmatprep.subr.bf16.mxu0 0
    %759 = vmatpush1.bf16.msra.mxu0 %v744
    %760 = vmatprep.subr.bf16.mxu0 0
    %761 = vmatpush1.bf16.msra.mxu0 0
    %762 = vmatprep.subr.bf16.mxu0 0
    %763 = vmatpush1.bf16.msra.mxu0 0
    %764 = vmatprep.subr.bf16.mxu0 0
    %765 = vmatpush1.bf16.msra.mxu0 0
    %766 = vmatprep.subr.bf16.mxu0 0
    %767 = vmatpush1.bf16.msra.mxu0 0
    %768 = vmatprep.subr.bf16.mxu0 0
    %769 = vmatpush1.bf16.msra.mxu0 0
    %770 = vmatprep.subr.bf16.mxu0 0
    %771 = vmatpush1.bf16.msra.mxu0 0
    %772 = vmatprep.subr.bf16.mxu0 0
    %773 = vmatpush1.bf16.msra.mxu0 0
    %774 = vmatprep.subr.bf16.mxu0 0
    %775 = vmatpush1.bf16.msra.mxu0 0
    %776 = vmatprep.subr.bf16.mxu0 0
    %777 = vmatpush1.bf16.msra.mxu0 0
    %778 = vmatprep.subr.bf16.mxu0 0
    %779 = vmatpush1.bf16.msra.mxu0 0
    %780 = vmatprep.subr.bf16.mxu0 0
    %781 = vmatpush1.bf16.msra.mxu0 0
    %782 = vmatprep.subr.bf16.mxu0 0
    %783 = vmatpush1.bf16.msra.mxu0 0
    %784 = vmatprep.mubr.bf16.mxu0 0
    %785 = vmatmul.mubr.bf16.gmra.mrb[0].mxu0 %v750
    %v786 = vpop.f32.mrb[0].mxu0
    %v787 = vadd.f32 %v723, %v786
    %v788 = vpop.f32.mrb[0].mxu0
    %v789 = vpop.f32.mrb[0].mxu0
    %v790 = vpop.f32.mrb[0].mxu0
    %791 = vdwg.mxu0
    %792 = vst [vmem:[#allocation2] sm:$0x3] %v787
    // Predicated region
    $region54: #{multimodal_cnn.3} parent=1 // pred_check
      _
    $region55: #{multimodal_cnn.3} parent=1 // pred_check_branch
      %794 = sbr.rel (0) target = $region57
    $region56: #{multimodal_cnn.3} parent=1 // pred_region
      %s796 = ssub.s32 32, 32
      %797 = vsyncadd [#allocation3], %s796
      %s799 = sshll.u32 [#allocation2], 4
      %s800 = int_to_ptr.vmem [resolvable:$true] %s799
      %802 = dma.vmem_to_hbm [thread:$0]  %s800, 32, %s13, [#allocation3]
    $region57: #{multimodal_cnn.3} parent=1 // pred_fallthru
      _
    // Predicated region
    $region58: #{multimodal_cnn.3} parent=1 // pred_check
      _
    $region59: #{multimodal_cnn.3} parent=1 // pred_check_branch
      %804 = sbr.rel (0) target = $region61
    $region60: #{multimodal_cnn.3} parent=1 // pred_region
      %805 = dma.done [#allocation3], 32
    $region61: #{multimodal_cnn.3} parent=1 // pred_fallthru
      _
    %806 = vsyncpa [#allocation3], 1

</llo_original>
